<compile_context>
chip_gen: v6e
topology: v6e:2x2x1
jax: 0.10.0
libtpu: 0.0.40
codegen_flags: <defaults>
</compile_context>

<pallas_src>
import jax
import jax.numpy as jnp
from jax.experimental import pallas as pl
from jax.experimental.pallas import tpu as pltpu


def dpr_kernel(claim_ref, evid_ref, wc_ref, bc_ref, we_ref, be_ref,
               mask_ref, rel_ref, sim_ref, loss_ref):
    B, H = claim_ref.shape
    E = wc_ref.shape[1]
    P = evid_ref.shape[0] // B
    P_pad = mask_ref.shape[1]

    # project_claim: [B, H] @ [H, E] + [1, E]        (MXU, bf16 in / f32 acc)
    c = jnp.dot(claim_ref[...], wc_ref[...],
                preferred_element_type=jnp.float32) + bc_ref[...]
    # project_evidence: [B*P, H] @ [H, E] + [1, E]   (MXU, bf16 in / f32 acc)
    e = jnp.dot(evid_ref[...], we_ref[...],
                preferred_element_type=jnp.float32) + be_ref[...]

    # torch.bmm([B,1,E], [B,E,P]).squeeze(1): batched MXU contraction.
    e3 = e.reshape(B, P, E)
    sim = jnp.einsum('bqe,bpe->bqp', c.reshape(B, 1, E), e3,
                     preferred_element_type=jnp.float32).reshape(B, P)

    # Scatter [B, P] -> lane-dense [B, P_pad] via a tiny selection matmul
    # (columns >= P become 0 and are masked below).
    sel = (jax.lax.broadcasted_iota(jnp.int32, (P, P_pad), 0) ==
           jax.lax.broadcasted_iota(jnp.int32, (P, P_pad), 1)
           ).astype(jnp.float32)
    sim_pad = jnp.dot(sim, sel, preferred_element_type=jnp.float32)

    m = mask_ref[...]     # [B, P_pad] f32, 1.0 = real evidence sentence
    rel = rel_ref[...]

    # sim_score.masked_fill_(~mask, -inf) -- single unmasked 128-lane store.
    sim_ref[...] = jnp.where(m > 0.0, sim_pad, -jnp.inf)

    # BCEWithLogitsLoss(reduction='none') in numerically stable form, computed
    # on the un-filled logits (avoids -inf*0 NaN), then masked_fill(0) and
    # sum()/mask.sum().
    bce = (jnp.maximum(sim_pad, 0.0) - sim_pad * rel
           + jnp.log(1.0 + jnp.exp(-jnp.abs(sim_pad))))
    bce = jnp.where(m > 0.0, bce, 0.0)
    denom = jnp.maximum(jnp.sum(m, keepdims=True), 1.0)   # guard: empty mask
    loss_ref[...] = jnp.sum(bce, keepdims=True) / denom


def dpr_forward(claim_pooled, evidence_pooled, mask, relevance, params):
    B, H = claim_pooled.shape
    _, P, _ = evidence_pooled.shape
    E = params["wc"].shape[1]
    P_pad = max(128, pl.cdiv(P, 128) * 128)

    # bf16 on the MXU operands (the DMA-bound path); everything else f32.
    claim_bf = claim_pooled.astype(jnp.bfloat16)
    ev_flat = evidence_pooled.reshape(B * P, H).astype(jnp.bfloat16)
    wc = params["wc"].astype(jnp.bfloat16)
    we = params["we"].astype(jnp.bfloat16)

    pad = ((0, 0), (0, P_pad - P))
    mask_f = jnp.pad(mask.astype(jnp.float32), pad)
    rel_f = jnp.pad(relevance.astype(jnp.float32), pad)

    im = lambda i: (0, 0)
    sim_full, loss = pl.pallas_call(
        dpr_kernel,
        grid=(1,),
        in_specs=[
            pl.BlockSpec((B, H), im),          # claim_pooled   (bf16)
            pl.BlockSpec((B * P, H), im),      # evidence_flat  (bf16)
            pl.BlockSpec((H, E), im),          # Wc             (bf16)
            pl.BlockSpec((1, E), im),          # bc             (f32)
            pl.BlockSpec((H, E), im),          # We             (bf16)
            pl.BlockSpec((1, E), im),          # be             (f32)
            pl.BlockSpec((B, P_pad), im),      # mask   (lane-padded, f32)
            pl.BlockSpec((B, P_pad), im),      # relevance (lane-padded, f32)
        ],
        out_specs=[
            pl.BlockSpec((B, P_pad), im),      # sim_score (lane-dense)
            pl.BlockSpec((1, 1), im),          # scalar loss
        ],
        out_shape=[
            jax.ShapeDtypeStruct((B, P_pad), jnp.float32),
            jax.ShapeDtypeStruct((1, 1), jnp.float32),
        ],
        compiler_params=pltpu.CompilerParams(
            dimension_semantics=("arbitrary",)),
    )(claim_bf, ev_flat, wc, params["bc"], we, params["be"], mask_f, rel_f)
    # TODO(synk): if B*P scales into the thousands, tile the evidence rows with
    # a real "parallel" grid axis (needed for v7x's 2 TCs / 64 MiB VMEM); at
    # B*P=16 a single full-array block is optimal.
    return sim_full[:, :P], loss[0, 0]


if __name__ == "__main__":
    B, P, H, E = 2, 8, 768, 128   # batch, max evidence/claim, encoder dim, emb_dim

    key = jax.random.PRNGKey(0)
    k1, k2, k3, k4, k5, k6, k7 = jax.random.split(key, 7)

    # TODO(synk): the pretrained DPR BERT encoders are not re-implemented; their
    # pooler_output tensors are synthesized here and fed directly to the kernel.
    claim_pooled = jax.random.normal(k1, (B, H), jnp.float32)
    evidence_pooled = jax.random.normal(k2, (B, P, H), jnp.float32)

    # Variable number of evidence sentences per claim (pad_sequence equivalent).
    num_sentences = jnp.array([5, 8], dtype=jnp.int32)
    mask = jnp.arange(P)[None, :] < num_sentences[:, None]       # [B, P] bool
    relevance = jax.random.bernoulli(k3, 0.3, (B, P)).astype(jnp.float32) * mask

    # Deterministic parameter init (nn.Linear(768, 128) x 2, stored transposed).
    params = {
        "wc": 0.02 * jax.random.normal(k4, (H, E), jnp.float32),
        "bc": 0.02 * jax.random.normal(k5, (1, E), jnp.float32),
        "we": 0.02 * jax.random.normal(k6, (H, E), jnp.float32),
        "be": 0.02 * jax.random.normal(k7, (1, E), jnp.float32),
    }

    sim, loss = dpr_forward(claim_pooled, evidence_pooled, mask, relevance, params)
    jax.block_until_ready((sim, loss))

    # Pure-JAX reference mirroring the kernel's intentional mixed precision
    # (bf16 MXU operands, f32 accumulation, f32 elementwise).
    hp = jax.lax.Precision.HIGHEST
    c_r = jnp.dot(claim_pooled.astype(jnp.bfloat16), params["wc"].astype(jnp.bfloat16),
                  precision=hp, preferred_element_type=jnp.float32) + params["bc"]
    e_r = jnp.einsum("bph,he->bpe", evidence_pooled.astype(jnp.bfloat16),
                     params["we"].astype(jnp.bfloat16), precision=hp,
                     preferred_element_type=jnp.float32) + params["be"]
    sim_r = jnp.einsum("be,bpe->bp", c_r, e_r, precision=hp)
    bce_r = (jnp.maximum(sim_r, 0.0) - sim_r * relevance
             + jnp.log(1.0 + jnp.exp(-jnp.abs(sim_r))))
    loss_r = jnp.sum(jnp.where(mask, bce_r, 0.0)) / jnp.sum(mask.astype(jnp.float32))
    sim_r = jnp.where(mask, sim_r, -jnp.inf)

    assert bool(jnp.allclose(sim, sim_r, rtol=1e-2, atol=1e-2))
    assert bool(jnp.allclose(loss, loss_r, rtol=1e-2, atol=1e-2))
    print("KERNEL_OK")
</pallas_src>

<mosaic_0001>
module attributes {stable_mosaic.version = 11 : i64} {
  func.func @dpr_kernel(%arg0: i32, %arg1: memref<2x768xbf16, #tpu.memory_space<vmem>>, %arg2: memref<16x768xbf16, #tpu.memory_space<vmem>>, %arg3: memref<768x128xbf16, #tpu.memory_space<vmem>>, %arg4: memref<1x128xf32, #tpu.memory_space<vmem>>, %arg5: memref<768x128xbf16, #tpu.memory_space<vmem>>, %arg6: memref<1x128xf32, #tpu.memory_space<vmem>>, %arg7: memref<2x128xf32, #tpu.memory_space<vmem>>, %arg8: memref<2x128xf32, #tpu.memory_space<vmem>>, %arg9: memref<2x128xf32, #tpu.memory_space<vmem>>, %arg10: memref<1x1xf32, #tpu.memory_space<vmem>>) attributes {dimension_semantics = [#tpu.dimension_semantics<arbitrary>], iteration_bounds = array<i64: 1>, scalar_prefetch = 0 : i64, scratch_operands = 0 : i64, tpu.core_type = #tpu.core_type<tc>, window_params = [{pipeline_mode = #tpu.pipeline_mode<synchronous>, transform_indices = @transform_0, window_bounds = array<i64: 2, 768>}, {pipeline_mode = #tpu.pipeline_mode<synchronous>, transform_indices = @transform_1, window_bounds = array<i64: 16, 768>}, {pipeline_mode = #tpu.pipeline_mode<synchronous>, transform_indices = @transform_2, window_bounds = array<i64: 768, 128>}, {pipeline_mode = #tpu.pipeline_mode<synchronous>, transform_indices = @transform_3, window_bounds = array<i64: 1, 128>}, {pipeline_mode = #tpu.pipeline_mode<synchronous>, transform_indices = @transform_4, window_bounds = array<i64: 768, 128>}, {pipeline_mode = #tpu.pipeline_mode<synchronous>, transform_indices = @transform_5, window_bounds = array<i64: 1, 128>}, {pipeline_mode = #tpu.pipeline_mode<synchronous>, transform_indices = @transform_6, window_bounds = array<i64: 2, 128>}, {pipeline_mode = #tpu.pipeline_mode<synchronous>, transform_indices = @transform_7, window_bounds = array<i64: 2, 128>}, {pipeline_mode = #tpu.pipeline_mode<synchronous>, transform_indices = @transform_8, window_bounds = array<i64: 2, 128>}, {pipeline_mode = #tpu.pipeline_mode<synchronous>, transform_indices = @transform_9, window_bounds = array<i64: 1, 1>}]} {
    %c0 = arith.constant 0 : index
    %c0_0 = arith.constant 0 : index
    %0 = vector.load %arg1[%c0, %c0_0] : memref<2x768xbf16, #tpu.memory_space<vmem>>, vector<2x768xbf16>
    %c0_1 = arith.constant 0 : index
    %c0_2 = arith.constant 0 : index
    %1 = vector.load %arg3[%c0_1, %c0_2] : memref<768x128xbf16, #tpu.memory_space<vmem>>, vector<768x128xbf16>
    %cst = arith.constant dense<0.000000e+00> : vector<2x128xf32>
    %2 = tpu.matmul %0, %1, %cst {dimension_numbers = #tpu.dot_dimension_numbers<[1], [0], [0], [1], [0, 0, 1, 1], [], []>} : vector<2x768xbf16>, vector<768x128xbf16>, vector<2x128xf32> -> vector<2x128xf32>
    %c0_3 = arith.constant 0 : index
    %c0_4 = arith.constant 0 : index
    %3 = vector.load %arg4[%c0_3, %c0_4] : memref<1x128xf32, #tpu.memory_space<vmem>>, vector<1x128xf32>
    %4 = vector.broadcast %3 : vector<1x128xf32> to vector<2x128xf32>
    %5 = arith.addf %2, %4 : vector<2x128xf32>
    %c0_5 = arith.constant 0 : index
    %c0_6 = arith.constant 0 : index
    %6 = vector.load %arg2[%c0_5, %c0_6] : memref<16x768xbf16, #tpu.memory_space<vmem>>, vector<16x768xbf16>
    %c0_7 = arith.constant 0 : index
    %c0_8 = arith.constant 0 : index
    %7 = vector.load %arg5[%c0_7, %c0_8] : memref<768x128xbf16, #tpu.memory_space<vmem>>, vector<768x128xbf16>
    %cst_9 = arith.constant dense<0.000000e+00> : vector<16x128xf32>
    %8 = tpu.matmul %6, %7, %cst_9 {dimension_numbers = #tpu.dot_dimension_numbers<[1], [0], [0], [1], [0, 0, 1, 1], [], []>} : vector<16x768xbf16>, vector<768x128xbf16>, vector<16x128xf32> -> vector<16x128xf32>
    %c0_10 = arith.constant 0 : index
    %c0_11 = arith.constant 0 : index
    %9 = vector.load %arg6[%c0_10, %c0_11] : memref<1x128xf32, #tpu.memory_space<vmem>>, vector<1x128xf32>
    %10 = vector.broadcast %9 : vector<1x128xf32> to vector<16x128xf32>
    %11 = arith.addf %8, %10 : vector<16x128xf32>
    %12 = vector.shape_cast %11 : vector<16x128xf32> to vector<2x8x128xf32>
    %13 = vector.shape_cast %5 : vector<2x128xf32> to vector<2x1x128xf32>
    "tpu.trace_start"() <{level = 10 : i32, message = "bqe,bpe->bqp"}> : () -> ()
    %cst_12 = arith.constant dense<0.000000e+00> : vector<2x1x8xf32>
    %14 = tpu.matmul %13, %12, %cst_12 {dimension_numbers = #tpu.dot_dimension_numbers<[2], [2], [1], [1], [0, 0, 0, 1, 1, 1], [0], [0]>} : vector<2x1x128xf32>, vector<2x8x128xf32>, vector<2x1x8xf32> -> vector<2x1x8xf32>
    "tpu.trace_stop"() : () -> ()
    %15 = vector.shape_cast %14 : vector<2x1x8xf32> to vector<2x8xf32>
    %16 = tpu.iota {dimensions = array<i32: 0>} : vector<8x128xi32>
    %17 = tpu.iota {dimensions = array<i32: 1>} : vector<8x128xi32>
    %18 = arith.cmpi eq, %16, %17 : vector<8x128xi32>
    %19 = arith.extui %18 : vector<8x128xi1> to vector<8x128xi32>
    %20 = arith.sitofp %19 : vector<8x128xi32> to vector<8x128xf32>
    %cst_13 = arith.constant dense<0.000000e+00> : vector<2x128xf32>
    %21 = tpu.matmul %15, %20, %cst_13 {dimension_numbers = #tpu.dot_dimension_numbers<[1], [0], [0], [1], [0, 0, 1, 1], [], []>} : vector<2x8xf32>, vector<8x128xf32>, vector<2x128xf32> -> vector<2x128xf32>
    %c0_14 = arith.constant 0 : index
    %c0_15 = arith.constant 0 : index
    %22 = vector.load %arg7[%c0_14, %c0_15] : memref<2x128xf32, #tpu.memory_space<vmem>>, vector<2x128xf32>
    %c0_16 = arith.constant 0 : index
    %c0_17 = arith.constant 0 : index
    %23 = vector.load %arg8[%c0_16, %c0_17] : memref<2x128xf32, #tpu.memory_space<vmem>>, vector<2x128xf32>
    %cst_18 = arith.constant 0.000000e+00 : f32
    %24 = vector.broadcast %cst_18 : f32 to vector<2x128xf32>
    %25 = arith.cmpf ogt, %22, %24 : vector<2x128xf32>
    %cst_19 = arith.constant 0xFF800000 : f32
    %26 = vector.broadcast %cst_19 : f32 to vector<2x128xf32>
    %27 = arith.select %25, %21, %26 : vector<2x128xi1>, vector<2x128xf32>
    %c0_20 = arith.constant 0 : index
    %c0_21 = arith.constant 0 : index
    %28 = vector.load %arg9[%c0_20, %c0_21] : memref<2x128xf32, #tpu.memory_space<vmem>>, vector<2x128xf32>
    tpu.vector_store %arg9[%c0_20, %c0_21], %27 {strides = array<i32>} : memref<2x128xf32, #tpu.memory_space<vmem>>, vector<2x128xf32>,
    %cst_22 = arith.constant 0.000000e+00 : f32
    %29 = vector.broadcast %cst_22 : f32 to vector<2x128xf32>
    %30 = arith.maximumf %21, %29 : vector<2x128xf32>
    %31 = arith.mulf %21, %23 : vector<2x128xf32>
    %32 = arith.subf %30, %31 : vector<2x128xf32>
    %33 = math.absf %21 : vector<2x128xf32>
    %cst_23 = arith.constant 0.000000e+00 : f32
    %34 = vector.broadcast %cst_23 : f32 to vector<2x128xf32>
    %35 = arith.subf %34, %33 : vector<2x128xf32>
    %36 = math.exp %35 : vector<2x128xf32>
    %cst_24 = arith.constant 1.000000e+00 : f32
    %37 = vector.broadcast %cst_24 : f32 to vector<2x128xf32>
    %38 = arith.addf %37, %36 : vector<2x128xf32>
    %39 = math.log %38 : vector<2x128xf32>
    %40 = arith.addf %32, %39 : vector<2x128xf32>
    %cst_25 = arith.constant 0.000000e+00 : f32
    %41 = vector.broadcast %cst_25 : f32 to vector<2x128xf32>
    %42 = arith.cmpf ogt, %22, %41 : vector<2x128xf32>
    %cst_26 = arith.constant 0.000000e+00 : f32
    %43 = vector.broadcast %cst_26 : f32 to vector<2x128xf32>
    %44 = arith.select %42, %40, %43 : vector<2x128xi1>, vector<2x128xf32>
    %45 = vector.shape_cast %22 : vector<2x128xf32> to vector<1x2x128xf32>
    %cst_27 = arith.constant dense<0.000000e+00> : vector<1xf32>
    %46 = vector.multi_reduction <add>, %45, %cst_27 [1, 2] : vector<1x2x128xf32> to vector<1xf32>
    %47 = vector.shape_cast %46 : vector<1xf32> to vector<1x1x1xf32>
    %48 = vector.extract %47[0, 0, 0] : f32 from vector<1x1x1xf32>
    %49 = vector.broadcast %48 : f32 to vector<1x1xf32>
    %cst_28 = arith.constant 1.000000e+00 : f32
    %50 = vector.broadcast %cst_28 : f32 to vector<1x1xf32>
    %51 = arith.maximumf %49, %50 : vector<1x1xf32>
    %52 = vector.shape_cast %44 : vector<2x128xf32> to vector<1x2x128xf32>
    %cst_29 = arith.constant dense<0.000000e+00> : vector<1xf32>
    %53 = vector.multi_reduction <add>, %52, %cst_29 [1, 2] : vector<1x2x128xf32> to vector<1xf32>
    %54 = vector.shape_cast %53 : vector<1xf32> to vector<1x1x1xf32>
    %55 = vector.extract %54[0, 0, 0] : f32 from vector<1x1x1xf32>
    %56 = vector.broadcast %55 : f32 to vector<1x1xf32>
    %57 = arith.divf %56, %51 : vector<1x1xf32>
    %c0_30 = arith.constant 0 : index
    %c0_31 = arith.constant 0 : index
    %58 = vector.load %arg10[%c0_30, %c0_31] : memref<1x1xf32, #tpu.memory_space<vmem>>, vector<1x1xf32>
    tpu.vector_store %arg10[%c0_30, %c0_31], %57 {strides = array<i32>} : memref<1x1xf32, #tpu.memory_space<vmem>>, vector<1x1xf32>,
    return
  }
  func.func @transform_0(%arg0: i32) -> (i32, i32) {
    %c0_i32 = arith.constant 0 : i32
    %c0_i32_0 = arith.constant 0 : i32
    %c0_i32_1 = arith.constant 0 : i32
    return %c0_i32, %c0_i32_0 : i32, i32
  }
  func.func @transform_1(%arg0: i32) -> (i32, i32) {
    %c0_i32 = arith.constant 0 : i32
    %c0_i32_0 = arith.constant 0 : i32
    %c0_i32_1 = arith.constant 0 : i32
    return %c0_i32, %c0_i32_0 : i32, i32
  }
  func.func @transform_2(%arg0: i32) -> (i32, i32) {
    %c0_i32 = arith.constant 0 : i32
    %c0_i32_0 = arith.constant 0 : i32
    %c0_i32_1 = arith.constant 0 : i32
    return %c0_i32, %c0_i32_0 : i32, i32
  }
  func.func @transform_3(%arg0: i32) -> (i32, i32) {
    %c0_i32 = arith.constant 0 : i32
    %c0_i32_0 = arith.constant 0 : i32
    %c0_i32_1 = arith.constant 0 : i32
    return %c0_i32, %c0_i32_0 : i32, i32
  }
  func.func @transform_4(%arg0: i32) -> (i32, i32) {
    %c0_i32 = arith.constant 0 : i32
    %c0_i32_0 = arith.constant 0 : i32
    %c0_i32_1 = arith.constant 0 : i32
    return %c0_i32, %c0_i32_0 : i32, i32
  }
  func.func @transform_5(%arg0: i32) -> (i32, i32) {
    %c0_i32 = arith.constant 0 : i32
    %c0_i32_0 = arith.constant 0 : i32
    %c0_i32_1 = arith.constant 0 : i32
    return %c0_i32, %c0_i32_0 : i32, i32
  }
  func.func @transform_6(%arg0: i32) -> (i32, i32) {
    %c0_i32 = arith.constant 0 : i32
    %c0_i32_0 = arith.constant 0 : i32
    %c0_i32_1 = arith.constant 0 : i32
    return %c0_i32, %c0_i32_0 : i32, i32
  }
  func.func @transform_7(%arg0: i32) -> (i32, i32) {
    %c0_i32 = arith.constant 0 : i32
    %c0_i32_0 = arith.constant 0 : i32
    %c0_i32_1 = arith.constant 0 : i32
    return %c0_i32, %c0_i32_0 : i32, i32
  }
  func.func @transform_8(%arg0: i32) -> (i32, i32) {
    %c0_i32 = arith.constant 0 : i32
    %c0_i32_0 = arith.constant 0 : i32
    %c0_i32_1 = arith.constant 0 : i32
    return %c0_i32, %c0_i32_0 : i32, i32
  }
  func.func @transform_9(%arg0: i32) -> (i32, i32) {
    %c0_i32 = arith.constant 0 : i32
    %c0_i32_0 = arith.constant 0 : i32
    %c0_i32_1 = arith.constant 0 : i32
    return %c0_i32, %c0_i32_0 : i32, i32
  }
}

</mosaic_0001>

<llo_original>
// kernel: tpu_custom_call.1
$region0: #{tpu_custom_call.1}
  #allocation0 [shape = 'u32[]', space=smem, size = 0x4, offset = 0x4, fixed_abs, tag = 'smem constant byte address 0x4 - core index']
  #allocation1 [shape = 'u32[144,128]{1,0:T(1,128)}', space=vmem, size = 0x12000, scoped, tag = 'internal scratch']
  %s0 = inlined_call_operand.hbm [shape: bf16[2,768], index: 0, kind: input, shape index: {}]
  %s1 = inlined_call_operand.hbm [shape: bf16[16,768], index: 1, kind: input, shape index: {}]
  %s2 = inlined_call_operand.hbm [shape: bf16[768,128], index: 2, kind: input, shape index: {}]
  %s3 = inlined_call_operand.vmem [shape: f32[1,128], index: 3, kind: input, shape index: {}]
  %s4 = inlined_call_operand.hbm [shape: bf16[768,128], index: 4, kind: input, shape index: {}]
  %s5 = inlined_call_operand.vmem [shape: f32[1,128], index: 5, kind: input, shape index: {}]
  %s6 = inlined_call_operand.vmem [shape: f32[2,128], index: 6, kind: input, shape index: {}]
  %s7 = inlined_call_operand.vmem [shape: f32[2,128], index: 7, kind: input, shape index: {}]
  %s8 = inlined_call_operand.hbm [shape: f32[2,128], index: 8, kind: output, shape index: {0}]
  %s9 = inlined_call_operand.hbm [shape: f32[1,1], index: 9, kind: output, shape index: {1}]
  %10 = xla_tuple %s8, %s9
  %s11 = sld [smem:[#allocation0]]
  $region66: #{tpu_custom_call.1} parent=0
    _
  %s13 = ssub.s32 1, %s11
  %s14 = scalar_select 0, %s13, %s11
  $region1: #{tpu_custom_call.1} parent=0
    #allocation2 [shape = 'u8[3072]{0}', space=vmem, size = 0xc00, scoped, tag = 'input window, operand 0, single buffered']
    #allocation3 [shape = 's32[1]{0}', space=sflag, size = 0x4, scoped, tag = 'scoped memory for tpu_custom_call.1']
    #allocation4 [shape = 's32[1]{0}', space=sflag, size = 0x4, scoped, tag = 'scoped memory for tpu_custom_call.1']
    #allocation5 [shape = 'u8[24576]{0}', space=vmem, size = 0x6000, scoped, tag = 'input window, operand 1, single buffered']
    #allocation6 [shape = 's32[1]{0}', space=sflag, size = 0x4, scoped, tag = 'scoped memory for tpu_custom_call.1']
    #allocation7 [shape = 'u8[196608]{0}', space=vmem, size = 0x30000, scoped, tag = 'input window, operand 2, single buffered']
    #allocation8 [shape = 'u8[196608]{0}', space=vmem, size = 0x30000, scoped, tag = 'input window, operand 4, single buffered']
    #allocation9 [shape = 's32[1]{0}', space=sflag, size = 0x4, scoped, tag = 'scoped memory for tpu_custom_call.1']
    #allocation10 [shape = 'u8[1024]{0}', space=vmem, size = 0x400, scoped, tag = 'output window, operand 0, single buffered']
    #allocation11 [shape = 'u8[512]{0}', space=vmem, size = 0x400, scoped, tag = 'output window, operand 1, single buffered']
    #allocation12 [shape = 's32[1]{0}', space=sflag, size = 0x4, scoped, tag = 'scoped memory for tpu_custom_call.1']
    %15 = vsyncpa [#allocation3], 0
    %16 = vsyncpa [#allocation6], 0
    %17 = vsyncpa [#allocation9], 0
    %18 = vsyncpa [#allocation4], 0
    %19 = vsyncpa [#allocation12], 0
    // Predicated region
    $region2: #{tpu_custom_call.1} parent=1 // pred_check
      _
    $region3: #{tpu_custom_call.1} parent=1 // pred_check_branch
      %21 = sbr.rel (0) target = $region5
    $region4: #{tpu_custom_call.1} parent=1 // pred_region
      %s23 = ssub.s32 96, 96
      %24 = vsyncadd [#allocation3], %s23
      %s26 = sshll.u32 [#allocation2], 4
      %s27 = int_to_ptr.vmem [resolvable:$true] %s26
      %29 = dma.hbm_to_vmem [thread:$0]  %s0, 96, %s27, [#allocation3]
    $region5: #{tpu_custom_call.1} parent=1 // pred_fallthru
      _
    // Predicated region
    $region6: #{tpu_custom_call.1} parent=1 // pred_check
      _
    $region7: #{tpu_custom_call.1} parent=1 // pred_check_branch
      %31 = sbr.rel (0) target = $region9
    $region8: #{tpu_custom_call.1} parent=1 // pred_region
      %s33 = ssub.s32 768, 768
      %34 = vsyncadd [#allocation6], %s33
      %s35 = sshll.u32 [#allocation5], 4
      %s36 = int_to_ptr.vmem [resolvable:$true] %s35
      %41 = dma.hbm_to_vmem [thread:$0]  %s1, 768, %s36, [#allocation6], 384, 384, 24
    $region9: #{tpu_custom_call.1} parent=1 // pred_fallthru
      _
    // Predicated region
    $region10: #{tpu_custom_call.1} parent=1 // pred_check
      _
    $region11: #{tpu_custom_call.1} parent=1 // pred_check_branch
      %43 = sbr.rel (0) target = $region13
    $region12: #{tpu_custom_call.1} parent=1 // pred_region
      %s45 = ssub.s32 6144, 6144
      %46 = vsyncadd [#allocation6], %s45
      %s47 = sshll.u32 [#allocation7], 4
      %s48 = int_to_ptr.vmem [resolvable:$true] %s47
      %53 = dma.hbm_to_vmem [thread:$0]  %s2, 6144, %s48, [#allocation6], 64, 64, 4
    $region13: #{tpu_custom_call.1} parent=1 // pred_fallthru
      _
    // Predicated region
    $region14: #{tpu_custom_call.1} parent=1 // pred_check
      _
    $region15: #{tpu_custom_call.1} parent=1 // pred_check_branch
      %55 = sbr.rel (0) target = $region17
    $region16: #{tpu_custom_call.1} parent=1 // pred_region
      _
    $region17: #{tpu_custom_call.1} parent=1 // pred_fallthru
      _
    // Predicated region
    $region18: #{tpu_custom_call.1} parent=1 // pred_check
      _
    $region19: #{tpu_custom_call.1} parent=1 // pred_check_branch
      %57 = sbr.rel (0) target = $region21
    $region20: #{tpu_custom_call.1} parent=1 // pred_region
      %s59 = ssub.s32 6144, 6144
      %60 = vsyncadd [#allocation9], %s59
      %s61 = sshll.u32 [#allocation8], 4
      %s62 = int_to_ptr.vmem [resolvable:$true] %s61
      %67 = dma.hbm_to_vmem [thread:$0]  %s4, 6144, %s62, [#allocation9], 64, 64, 4
    $region21: #{tpu_custom_call.1} parent=1 // pred_fallthru
      _
    // Predicated region
    $region22: #{tpu_custom_call.1} parent=1 // pred_check
      _
    $region23: #{tpu_custom_call.1} parent=1 // pred_check_branch
      %69 = sbr.rel (0) target = $region25
    $region24: #{tpu_custom_call.1} parent=1 // pred_region
      _
    $region25: #{tpu_custom_call.1} parent=1 // pred_fallthru
      _
    // Predicated region
    $region26: #{tpu_custom_call.1} parent=1 // pred_check
      _
    $region27: #{tpu_custom_call.1} parent=1 // pred_check_branch
      %71 = sbr.rel (0) target = $region29
    $region28: #{tpu_custom_call.1} parent=1 // pred_region
      _
    $region29: #{tpu_custom_call.1} parent=1 // pred_fallthru
      _
    // Predicated region
    $region30: #{tpu_custom_call.1} parent=1 // pred_check
      _
    $region31: #{tpu_custom_call.1} parent=1 // pred_check_branch
      %73 = sbr.rel (0) target = $region33
    $region32: #{tpu_custom_call.1} parent=1 // pred_region
      _
    $region33: #{tpu_custom_call.1} parent=1 // pred_fallthru
      _
    // Predicated region
    $region34: #{tpu_custom_call.1} parent=1 // pred_check
      _
    $region35: #{tpu_custom_call.1} parent=1 // pred_check_branch
      %75 = sbr.rel (0) target = $region37
    $region36: #{tpu_custom_call.1} parent=1 // pred_region
      %76 = dma.done [#allocation3], 96
    $region37: #{tpu_custom_call.1} parent=1 // pred_fallthru
      _
    // Predicated region
    $region38: #{tpu_custom_call.1} parent=1 // pred_check
      _
    $region39: #{tpu_custom_call.1} parent=1 // pred_check_branch
      %78 = sbr.rel (0) target = $region41
    $region40: #{tpu_custom_call.1} parent=1 // pred_region
      %79 = dma.done [#allocation6], 768
    $region41: #{tpu_custom_call.1} parent=1 // pred_fallthru
      _
    // Predicated region
    $region42: #{tpu_custom_call.1} parent=1 // pred_check
      _
    $region43: #{tpu_custom_call.1} parent=1 // pred_check_branch
      %81 = sbr.rel (0) target = $region45
    $region44: #{tpu_custom_call.1} parent=1 // pred_region
      %82 = dma.done [#allocation6], 6144
    $region45: #{tpu_custom_call.1} parent=1 // pred_fallthru
      _
    // Predicated region
    $region46: #{tpu_custom_call.1} parent=1 // pred_check
      _
    $region47: #{tpu_custom_call.1} parent=1 // pred_check_branch
      %84 = sbr.rel (0) target = $region49
    $region48: #{tpu_custom_call.1} parent=1 // pred_region
      %85 = dma.done [#allocation9], 6144
    $region49: #{tpu_custom_call.1} parent=1 // pred_fallthru
      _
    %v87 = vld [vmem:[#allocation2] sm:$0x3f]
    %v88 = vld [vmem:[#allocation7] sm:$0xf]
    %v89 = vld [vmem:[#allocation7 + $0x4] sm:$0xf]
    %v90 = vld [vmem:[#allocation7 + $0x8] sm:$0xf]
    %v91 = vld [vmem:[#allocation7 + $0xc] sm:$0xf]
    %v92 = vld [vmem:[#allocation7 + $0x10] sm:$0xf]
    %v93 = vld [vmem:[#allocation7 + $0x14] sm:$0xf]
    %v94 = vld [vmem:[#allocation7 + $0x18] sm:$0xf]
    %v95 = vld [vmem:[#allocation7 + $0x1c] sm:$0xf]
    %v96 = vld [vmem:[#allocation7 + $0x20] sm:$0xf]
    %v97 = vld [vmem:[#allocation7 + $0x24] sm:$0xf]
    %v98 = vld [vmem:[#allocation7 + $0x28] sm:$0xf]
    %v99 = vld [vmem:[#allocation7 + $0x2c] sm:$0xf]
    %v100 = vld [vmem:[#allocation7 + $0x30] sm:$0xf]
    %v101 = vld [vmem:[#allocation7 + $0x34] sm:$0xf]
    %v102 = vld [vmem:[#allocation7 + $0x38] sm:$0xf]
    %v103 = vld [vmem:[#allocation7 + $0x3c] sm:$0xf]
    %v104 = vld [vmem:[#allocation7 + $0x40] sm:$0xf]
    %v105 = vld [vmem:[#allocation7 + $0x44] sm:$0xf]
    %v106 = vld [vmem:[#allocation7 + $0x48] sm:$0xf]
    %v107 = vld [vmem:[#allocation7 + $0x4c] sm:$0xf]
    %v108 = vld [vmem:[#allocation7 + $0x50] sm:$0xf]
    %v109 = vld [vmem:[#allocation7 + $0x54] sm:$0xf]
    %v110 = vld [vmem:[#allocation7 + $0x58] sm:$0xf]
    %v111 = vld [vmem:[#allocation7 + $0x5c] sm:$0xf]
    %v112 = vld [vmem:[#allocation7 + $0x60] sm:$0xf]
    %v113 = vld [vmem:[#allocation7 + $0x64] sm:$0xf]
    %v114 = vld [vmem:[#allocation7 + $0x68] sm:$0xf]
    %v115 = vld [vmem:[#allocation7 + $0x6c] sm:$0xf]
    %v116 = vld [vmem:[#allocation7 + $0x70] sm:$0xf]
    %v117 = vld [vmem:[#allocation7 + $0x74] sm:$0xf]
    %v118 = vld [vmem:[#allocation7 + $0x78] sm:$0xf]
    %v119 = vld [vmem:[#allocation7 + $0x7c] sm:$0xf]
    %v120 = vld [vmem:[#allocation7 + $0x80] sm:$0xf]
    %v121 = vld [vmem:[#allocation7 + $0x84] sm:$0xf]
    %v122 = vld [vmem:[#allocation7 + $0x88] sm:$0xf]
    %v123 = vld [vmem:[#allocation7 + $0x8c] sm:$0xf]
    %v124 = vld [vmem:[#allocation7 + $0x90] sm:$0xf]
    %v125 = vld [vmem:[#allocation7 + $0x94] sm:$0xf]
    %v126 = vld [vmem:[#allocation7 + $0x98] sm:$0xf]
    %v127 = vld [vmem:[#allocation7 + $0x9c] sm:$0xf]
    %v128 = vld [vmem:[#allocation7 + $0xa0] sm:$0xf]
    %v129 = vld [vmem:[#allocation7 + $0xa4] sm:$0xf]
    %v130 = vld [vmem:[#allocation7 + $0xa8] sm:$0xf]
    %v131 = vld [vmem:[#allocation7 + $0xac] sm:$0xf]
    %v132 = vld [vmem:[#allocation7 + $0xb0] sm:$0xf]
    %v133 = vld [vmem:[#allocation7 + $0xb4] sm:$0xf]
    %v134 = vld [vmem:[#allocation7 + $0xb8] sm:$0xf]
    %v135 = vld [vmem:[#allocation7 + $0xbc] sm:$0xf]
    %v136 = vld [vmem:[#allocation7 + $0xc0] sm:$0xf]
    %v137 = vld [vmem:[#allocation7 + $0xc4] sm:$0xf]
    %v138 = vld [vmem:[#allocation7 + $0xc8] sm:$0xf]
    %v139 = vld [vmem:[#allocation7 + $0xcc] sm:$0xf]
    %v140 = vld [vmem:[#allocation7 + $0xd0] sm:$0xf]
    %v141 = vld [vmem:[#allocation7 + $0xd4] sm:$0xf]
    %v142 = vld [vmem:[#allocation7 + $0xd8] sm:$0xf]
    %v143 = vld [vmem:[#allocation7 + $0xdc] sm:$0xf]
    %v144 = vld [vmem:[#allocation7 + $0xe0] sm:$0xf]
    %v145 = vld [vmem:[#allocation7 + $0xe4] sm:$0xf]
    %v146 = vld [vmem:[#allocation7 + $0xe8] sm:$0xf]
    %v147 = vld [vmem:[#allocation7 + $0xec] sm:$0xf]
    %v148 = vld [vmem:[#allocation7 + $0xf0] sm:$0xf]
    %v149 = vld [vmem:[#allocation7 + $0xf4] sm:$0xf]
    %v150 = vld [vmem:[#allocation7 + $0xf8] sm:$0xf]
    %v151 = vld [vmem:[#allocation7 + $0xfc] sm:$0xf]
    %v152 = vld [vmem:[#allocation7 + $0x100] sm:$0xf]
    %v153 = vld [vmem:[#allocation7 + $0x104] sm:$0xf]
    %v154 = vld [vmem:[#allocation7 + $0x108] sm:$0xf]
    %v155 = vld [vmem:[#allocation7 + $0x10c] sm:$0xf]
    %v156 = vld [vmem:[#allocation7 + $0x110] sm:$0xf]
    %v157 = vld [vmem:[#allocation7 + $0x114] sm:$0xf]
    %v158 = vld [vmem:[#allocation7 + $0x118] sm:$0xf]
    %v159 = vld [vmem:[#allocation7 + $0x11c] sm:$0xf]
    %v160 = vld [vmem:[#allocation7 + $0x120] sm:$0xf]
    %v161 = vld [vmem:[#allocation7 + $0x124] sm:$0xf]
    %v162 = vld [vmem:[#allocation7 + $0x128] sm:$0xf]
    %v163 = vld [vmem:[#allocation7 + $0x12c] sm:$0xf]
    %v164 = vld [vmem:[#allocation7 + $0x130] sm:$0xf]
    %v165 = vld [vmem:[#allocation7 + $0x134] sm:$0xf]
    %v166 = vld [vmem:[#allocation7 + $0x138] sm:$0xf]
    %v167 = vld [vmem:[#allocation7 + $0x13c] sm:$0xf]
    %v168 = vld [vmem:[#allocation7 + $0x140] sm:$0xf]
    %v169 = vld [vmem:[#allocation7 + $0x144] sm:$0xf]
    %v170 = vld [vmem:[#allocation7 + $0x148] sm:$0xf]
    %v171 = vld [vmem:[#allocation7 + $0x14c] sm:$0xf]
    %v172 = vld [vmem:[#allocation7 + $0x150] sm:$0xf]
    %v173 = vld [vmem:[#allocation7 + $0x154] sm:$0xf]
    %v174 = vld [vmem:[#allocation7 + $0x158] sm:$0xf]
    %v175 = vld [vmem:[#allocation7 + $0x15c] sm:$0xf]
    %v176 = vld [vmem:[#allocation7 + $0x160] sm:$0xf]
    %v177 = vld [vmem:[#allocation7 + $0x164] sm:$0xf]
    %v178 = vld [vmem:[#allocation7 + $0x168] sm:$0xf]
    %v179 = vld [vmem:[#allocation7 + $0x16c] sm:$0xf]
    %v180 = vld [vmem:[#allocation7 + $0x170] sm:$0xf]
    %v181 = vld [vmem:[#allocation7 + $0x174] sm:$0xf]
    %v182 = vld [vmem:[#allocation7 + $0x178] sm:$0xf]
    %v183 = vld [vmem:[#allocation7 + $0x17c] sm:$0xf]
    %v184 = vld [vmem:[%s3] sm:$0x1]
    %v186 = vlaneseq
    %v187 = vshrl.u32 %v186, 7
    %v188 = vsub.s32 0, %v187
    %v189 = vrot.slane %v184, %v188
    %v192 = vcombine.high %v87, %v87
    %v194 = vunpack.c.l.s4 1966171168
    %v195 = vunpack.c.0.s8 %v194
    %v196 = vlaneseq
    %v197 = vshrl.u32 %v196, 7
    %v198 = vsub.s32 %v195, %v197
    %v199 = vrot.slane %v87, %v198
    %v201 = vunpack.c.l.s4 1966171168
    %v202 = vunpack.c.0.s8 %v201
    %v203 = vlaneseq
    %v204 = vshrl.u32 %v203, 7
    %v205 = vsub.s32 %v202, %v204
    %v206 = vrot.slane %v192, %v205
    %v207 = vcombine.high %v199, %v199
    %v208 = vcombine.high %v206, %v206
    %v210 = vunpack.c.l.s4 1966171168
    %v211 = vunpack.c.0.s8 %v210
    %v212 = vlaneseq
    %v213 = vshrl.u32 %v212, 7
    %v214 = vsub.s32 %v211, %v213
    %v215 = vrot.slane %v199, %v214
    %v217 = vunpack.c.l.s4 1966171168
    %v218 = vunpack.c.0.s8 %v217
    %v219 = vlaneseq
    %v220 = vshrl.u32 %v219, 7
    %v221 = vsub.s32 %v218, %v220
    %v222 = vrot.slane %v206, %v221
    %v224 = vunpack.c.l.s4 1966171168
    %v225 = vunpack.c.0.s8 %v224
    %v226 = vlaneseq
    %v227 = vshrl.u32 %v226, 7
    %v228 = vsub.s32 %v225, %v227
    %v229 = vrot.slane %v207, %v228
    %v231 = vunpack.c.l.s4 1966171168
    %v232 = vunpack.c.0.s8 %v231
    %v233 = vlaneseq
    %v234 = vshrl.u32 %v233, 7
    %v235 = vsub.s32 %v232, %v234
    %v236 = vrot.slane %v208, %v235
    %v237 = vcombine.high %v215, %v215
    %v238 = vcombine.high %v229, %v229
    %v341 = vunpack.c.l.b16 %v88
    %v342 = vunpack.c.l.b16 %v89
    %v343 = vunpack.c.l.b16 %v90
    %v344 = vunpack.c.l.b16 %v91
    %v345 = vunpack.c.l.b16 %v92
    %v346 = vunpack.c.l.b16 %v93
    %v347 = vunpack.c.l.b16 %v94
    %v348 = vunpack.c.l.b16 %v95
    %v349 = vunpack.c.l.b16 %v96
    %v350 = vunpack.c.l.b16 %v97
    %v351 = vunpack.c.l.b16 %v98
    %v352 = vunpack.c.l.b16 %v99
    %v353 = vunpack.c.l.b16 %v100
    %v354 = vunpack.c.l.b16 %v101
    %v355 = vunpack.c.l.b16 %v102
    %v356 = vunpack.c.l.b16 %v103
    %v357 = vunpack.c.l.b16 %v104
    %v358 = vunpack.c.l.b16 %v105
    %v359 = vunpack.c.l.b16 %v106
    %v360 = vunpack.c.l.b16 %v107
    %v361 = vunpack.c.l.b16 %v108
    %v362 = vunpack.c.l.b16 %v109
    %v363 = vunpack.c.l.b16 %v110
    %v364 = vunpack.c.l.b16 %v111
    %v365 = vunpack.c.l.b16 %v112
    %v366 = vunpack.c.l.b16 %v113
    %v367 = vunpack.c.l.b16 %v114
    %v368 = vunpack.c.l.b16 %v115
    %v369 = vunpack.c.l.b16 %v116
    %v370 = vunpack.c.l.b16 %v117
    %v371 = vunpack.c.l.b16 %v118
    %v372 = vunpack.c.l.b16 %v119
    %v373 = vunpack.c.l.b16 %v120
    %v374 = vunpack.c.l.b16 %v121
    %v375 = vunpack.c.l.b16 %v122
    %v376 = vunpack.c.l.b16 %v123
    %v377 = vunpack.c.l.b16 %v124
    %v378 = vunpack.c.l.b16 %v125
    %v379 = vunpack.c.l.b16 %v126
    %v380 = vunpack.c.l.b16 %v127
    %v381 = vunpack.c.l.b16 %v128
    %v382 = vunpack.c.l.b16 %v129
    %v383 = vunpack.c.l.b16 %v130
    %v384 = vunpack.c.l.b16 %v131
    %v385 = vunpack.c.l.b16 %v132
    %v386 = vunpack.c.l.b16 %v133
    %v387 = vunpack.c.l.b16 %v134
    %v388 = vunpack.c.l.b16 %v135
    %v389 = vunpack.c.l.b16 %v136
    %v390 = vunpack.c.l.b16 %v137
    %v391 = vunpack.c.l.b16 %v138
    %v392 = vunpack.c.l.b16 %v139
    %v393 = vunpack.c.l.b16 %v140
    %v394 = vunpack.c.l.b16 %v141
    %v395 = vunpack.c.l.b16 %v142
    %v396 = vunpack.c.l.b16 %v143
    %v397 = vunpack.c.l.b16 %v144
    %v398 = vunpack.c.l.b16 %v145
    %v399 = vunpack.c.l.b16 %v146
    %v400 = vunpack.c.l.b16 %v147
    %v401 = vunpack.c.l.b16 %v148
    %v402 = vunpack.c.l.b16 %v149
    %v403 = vunpack.c.l.b16 %v150
    %v404 = vunpack.c.l.b16 %v151
    %v405 = vunpack.c.l.b16 %v152
    %v406 = vunpack.c.l.b16 %v153
    %v407 = vunpack.c.l.b16 %v154
    %v408 = vunpack.c.l.b16 %v155
    %v409 = vunpack.c.l.b16 %v156
    %v410 = vunpack.c.l.b16 %v157
    %v411 = vunpack.c.l.b16 %v158
    %v412 = vunpack.c.l.b16 %v159
    %v413 = vunpack.c.l.b16 %v160
    %v414 = vunpack.c.l.b16 %v161
    %v415 = vunpack.c.l.b16 %v162
    %v416 = vunpack.c.l.b16 %v163
    %v417 = vunpack.c.l.b16 %v164
    %v418 = vunpack.c.l.b16 %v165
    %v419 = vunpack.c.l.b16 %v166
    %v420 = vunpack.c.l.b16 %v167
    %v421 = vunpack.c.l.b16 %v168
    %v422 = vunpack.c.l.b16 %v169
    %v423 = vunpack.c.l.b16 %v170
    %v424 = vunpack.c.l.b16 %v171
    %v425 = vunpack.c.l.b16 %v172
    %v426 = vunpack.c.l.b16 %v173
    %v427 = vunpack.c.l.b16 %v174
    %v428 = vunpack.c.l.b16 %v175
    %v429 = vunpack.c.l.b16 %v176
    %v430 = vunpack.c.l.b16 %v177
    %v431 = vunpack.c.l.b16 %v178
    %v432 = vunpack.c.l.b16 %v179
    %v433 = vunpack.c.l.b16 %v180
    %v434 = vunpack.c.l.b16 %v181
    %v435 = vunpack.c.l.b16 %v182
    %v436 = vunpack.c.l.b16 %v183
    %v437 = vpack.c.b16 %v342, %v341
    %v438 = vpack.c.b16 %v344, %v343
    %v439 = vpack.c.b16 %v346, %v345
    %v440 = vpack.c.b16 %v348, %v347
    %v441 = vpack.c.b16 %v350, %v349
    %v442 = vpack.c.b16 %v352, %v351
    %v443 = vpack.c.b16 %v354, %v353
    %v444 = vpack.c.b16 %v356, %v355
    %v445 = vpack.c.b16 %v358, %v357
    %v446 = vpack.c.b16 %v360, %v359
    %v447 = vpack.c.b16 %v362, %v361
    %v448 = vpack.c.b16 %v364, %v363
    %v449 = vpack.c.b16 %v366, %v365
    %v450 = vpack.c.b16 %v368, %v367
    %v451 = vpack.c.b16 %v370, %v369
    %v452 = vpack.c.b16 %v372, %v371
    %v453 = vpack.c.b16 %v374, %v373
    %v454 = vpack.c.b16 %v376, %v375
    %v455 = vpack.c.b16 %v378, %v377
    %v456 = vpack.c.b16 %v380, %v379
    %v457 = vpack.c.b16 %v382, %v381
    %v458 = vpack.c.b16 %v384, %v383
    %v459 = vpack.c.b16 %v386, %v385
    %v460 = vpack.c.b16 %v388, %v387
    %v461 = vpack.c.b16 %v390, %v389
    %v462 = vpack.c.b16 %v392, %v391
    %v463 = vpack.c.b16 %v394, %v393
    %v464 = vpack.c.b16 %v396, %v395
    %v465 = vpack.c.b16 %v398, %v397
    %v466 = vpack.c.b16 %v400, %v399
    %v467 = vpack.c.b16 %v402, %v401
    %v468 = vpack.c.b16 %v404, %v403
    %v469 = vpack.c.b16 %v406, %v405
    %v470 = vpack.c.b16 %v408, %v407
    %v471 = vpack.c.b16 %v410, %v409
    %v472 = vpack.c.b16 %v412, %v411
    %v473 = vpack.c.b16 %v414, %v413
    %v474 = vpack.c.b16 %v416, %v415
    %v475 = vpack.c.b16 %v418, %v417
    %v476 = vpack.c.b16 %v420, %v419
    %v477 = vpack.c.b16 %v422, %v421
    %v478 = vpack.c.b16 %v424, %v423
    %v479 = vpack.c.b16 %v426, %v425
    %v480 = vpack.c.b16 %v428, %v427
    %v481 = vpack.c.b16 %v430, %v429
    %v482 = vpack.c.b16 %v432, %v431
    %v483 = vpack.c.b16 %v434, %v433
    %v484 = vpack.c.b16 %v436, %v435
    %533 = vmatprep.subr.bf16.mxu0 0
    %534 = vmatpush1.bf16.msra.mxu0 %v444
    %535 = vmatprep.subr.bf16.mxu0 0
    %536 = vmatpush1.bf16.msra.mxu0 %v443
    %537 = vmatprep.subr.bf16.mxu0 0
    %538 = vmatpush1.bf16.msra.mxu0 %v442
    %539 = vmatprep.subr.bf16.mxu0 0
    %540 = vmatpush1.bf16.msra.mxu0 %v441
    %541 = vmatprep.subr.bf16.mxu0 0
    %542 = vmatpush1.bf16.msra.mxu0 %v440
    %543 = vmatprep.subr.bf16.mxu0 0
    %544 = vmatpush1.bf16.msra.mxu0 %v439
    %545 = vmatprep.subr.bf16.mxu0 0
    %546 = vmatpush1.bf16.msra.mxu0 %v438
    %547 = vmatprep.subr.bf16.mxu0 0
    %548 = vmatpush1.bf16.msra.mxu0 %v437
    %549 = vmatprep.subr.bf16.mxu0 0
    %550 = vmatpush2.bf16.msra.mxu0 %v452
    %551 = vmatprep.subr.bf16.mxu0 0
    %552 = vmatpush2.bf16.msra.mxu0 %v451
    %553 = vmatprep.subr.bf16.mxu0 0
    %554 = vmatpush2.bf16.msra.mxu0 %v450
    %555 = vmatprep.subr.bf16.mxu0 0
    %556 = vmatpush2.bf16.msra.mxu0 %v449
    %557 = vmatprep.subr.bf16.mxu0 0
    %558 = vmatpush2.bf16.msra.mxu0 %v448
    %559 = vmatprep.subr.bf16.mxu0 0
    %560 = vmatpush2.bf16.msra.mxu0 %v447
    %561 = vmatprep.subr.bf16.mxu0 0
    %562 = vmatpush2.bf16.msra.mxu0 %v446
    %563 = vmatprep.subr.bf16.mxu0 0
    %564 = vmatpush2.bf16.msra.mxu0 %v445
    %565 = vmatprep.mubr.bf16.mxu0 %v229
    %566 = vmatmul.mubr.bf16.gmra.mxu0 %v215
    %v567 = vpop.f32.mrf.mxu0
    %v568 = vadd.f32 %v189, %v567
    %v569 = vpop.f32.mrf.mxu0
    %v570 = vpop.f32.mrf.mxu0
    %v571 = vpop.f32.mrf.mxu0
    %572 = vdwg.mxu0
    %573 = vmatprep.subr.bf16.mxu0 0
    %574 = vmatpush1.bf16.msra.mxu0 %v460
    %575 = vmatprep.subr.bf16.mxu0 0
    %576 = vmatpush1.bf16.msra.mxu0 %v459
    %577 = vmatprep.subr.bf16.mxu0 0
    %578 = vmatpush1.bf16.msra.mxu0 %v458
    %579 = vmatprep.subr.bf16.mxu0 0
    %580 = vmatpush1.bf16.msra.mxu0 %v457
    %581 = vmatprep.subr.bf16.mxu0 0
    %582 = vmatpush1.bf16.msra.mxu0 %v456
    %583 = vmatprep.subr.bf16.mxu0 0
    %584 = vmatpush1.bf16.msra.mxu0 %v455
    %585 = vmatprep.subr.bf16.mxu0 0
    %586 = vmatpush1.bf16.msra.mxu0 %v454
    %587 = vmatprep.subr.bf16.mxu0 0
    %588 = vmatpush1.bf16.msra.mxu0 %v453
    %589 = vmatprep.subr.bf16.mxu0 0
    %590 = vmatpush2.bf16.msra.mxu0 %v468
    %591 = vmatprep.subr.bf16.mxu0 0
    %592 = vmatpush2.bf16.msra.mxu0 %v467
    %593 = vmatprep.subr.bf16.mxu0 0
    %594 = vmatpush2.bf16.msra.mxu0 %v466
    %595 = vmatprep.subr.bf16.mxu0 0
    %596 = vmatpush2.bf16.msra.mxu0 %v465
    %597 = vmatprep.subr.bf16.mxu0 0
    %598 = vmatpush2.bf16.msra.mxu0 %v464
    %599 = vmatprep.subr.bf16.mxu0 0
    %600 = vmatpush2.bf16.msra.mxu0 %v463
    %601 = vmatprep.subr.bf16.mxu0 0
    %602 = vmatpush2.bf16.msra.mxu0 %v462
    %603 = vmatprep.subr.bf16.mxu0 0
    %604 = vmatpush2.bf16.msra.mxu0 %v461
    %605 = vmatprep.mubr.bf16.mxu0 %v238
    %606 = vmatmul.mubr.bf16.gmra.mxu0 %v237
    %v607 = vpop.f32.mrf.mxu0
    %v608 = vadd.f32 %v568, %v607
    %v609 = vpop.f32.mrf.mxu0
    %v610 = vpop.f32.mrf.mxu0
    %v611 = vpop.f32.mrf.mxu0
    %612 = vdwg.mxu0
    %613 = vmatprep.subr.bf16.mxu0 0
    %614 = vmatpush1.bf16.msra.mxu0 %v476
    %615 = vmatprep.subr.bf16.mxu0 0
    %616 = vmatpush1.bf16.msra.mxu0 %v475
    %617 = vmatprep.subr.bf16.mxu0 0
    %618 = vmatpush1.bf16.msra.mxu0 %v474
    %619 = vmatprep.subr.bf16.mxu0 0
    %620 = vmatpush1.bf16.msra.mxu0 %v473
    %621 = vmatprep.subr.bf16.mxu0 0
    %622 = vmatpush1.bf16.msra.mxu0 %v472
    %623 = vmatprep.subr.bf16.mxu0 0
    %624 = vmatpush1.bf16.msra.mxu0 %v471
    %625 = vmatprep.subr.bf16.mxu0 0
    %626 = vmatpush1.bf16.msra.mxu0 %v470
    %627 = vmatprep.subr.bf16.mxu0 0
    %628 = vmatpush1.bf16.msra.mxu0 %v469
    %629 = vmatprep.subr.bf16.mxu0 0
    %630 = vmatpush2.bf16.msra.mxu0 %v484
    %631 = vmatprep.subr.bf16.mxu0 0
    %632 = vmatpush2.bf16.msra.mxu0 %v483
    %633 = vmatprep.subr.bf16.mxu0 0
    %634 = vmatpush2.bf16.msra.mxu0 %v482
    %635 = vmatprep.subr.bf16.mxu0 0
    %636 = vmatpush2.bf16.msra.mxu0 %v481
    %637 = vmatprep.subr.bf16.mxu0 0
    %638 = vmatpush2.bf16.msra.mxu0 %v480
    %639 = vmatprep.subr.bf16.mxu0 0
    %640 = vmatpush2.bf16.msra.mxu0 %v479
    %641 = vmatprep.subr.bf16.mxu0 0
    %642 = vmatpush2.bf16.msra.mxu0 %v478
    %643 = vmatprep.subr.bf16.mxu0 0
    %644 = vmatpush2.bf16.msra.mxu0 %v477
    %645 = vmatprep.mubr.bf16.mxu0 %v236
    %646 = vmatmul.mubr.bf16.gmra.mxu0 %v222
    %v647 = vpop.f32.mrf.mxu0
    %v648 = vadd.f32 %v608, %v647
    %v649 = vpop.f32.mrf.mxu0
    %v650 = vpop.f32.mrf.mxu0
    %v651 = vpop.f32.mrf.mxu0
    %652 = vdwg.mxu0
    %v653 = vld [vmem:[#allocation5] sm:$0xff]
    %v654 = vld [vmem:[#allocation5 + $0x8] sm:$0xff]
    %v655 = vld [vmem:[#allocation5 + $0x10] sm:$0xff]
    %v656 = vld [vmem:[#allocation5 + $0x18] sm:$0xff]
    %v657 = vld [vmem:[#allocation5 + $0x20] sm:$0xff]
    %v658 = vld [vmem:[#allocation5 + $0x28] sm:$0xff]
    %v659 = vld [vmem:[#allocation8] sm:$0xf]
    %v660 = vld [vmem:[#allocation8 + $0x4] sm:$0xf]
    %v661 = vld [vmem:[#allocation8 + $0x8] sm:$0xf]
    %v662 = vld [vmem:[#allocation8 + $0xc] sm:$0xf]
    %v663 = vld [vmem:[#allocation8 + $0x10] sm:$0xf]
    %v664 = vld [vmem:[#allocation8 + $0x14] sm:$0xf]
    %v665 = vld [vmem:[#allocation8 + $0x18] sm:$0xf]
    %v666 = vld [vmem:[#allocation8 + $0x1c] sm:$0xf]
    %v667 = vld [vmem:[#allocation8 + $0x20] sm:$0xf]
    %v668 = vld [vmem:[#allocation8 + $0x24] sm:$0xf]
    %v669 = vld [vmem:[#allocation8 + $0x28] sm:$0xf]
    %v670 = vld [vmem:[#allocation8 + $0x2c] sm:$0xf]
    %v671 = vld [vmem:[#allocation8 + $0x30] sm:$0xf]
    %v672 = vld [vmem:[#allocation8 + $0x34] sm:$0xf]
    %v673 = vld [vmem:[#allocation8 + $0x38] sm:$0xf]
    %v674 = vld [vmem:[#allocation8 + $0x3c] sm:$0xf]
    %v675 = vld [vmem:[#allocation8 + $0x40] sm:$0xf]
    %v676 = vld [vmem:[#allocation8 + $0x44] sm:$0xf]
    %v677 = vld [vmem:[#allocation8 + $0x48] sm:$0xf]
    %v678 = vld [vmem:[#allocation8 + $0x4c] sm:$0xf]
    %v679 = vld [vmem:[#allocation8 + $0x50] sm:$0xf]
    %v680 = vld [vmem:[#allocation8 + $0x54] sm:$0xf]
    %v681 = vld [vmem:[#allocation8 + $0x58] sm:$0xf]
    %v682 = vld [vmem:[#allocation8 + $0x5c] sm:$0xf]
    %v683 = vld [vmem:[#allocation8 + $0x60] sm:$0xf]
    %v684 = vld [vmem:[#allocation8 + $0x64] sm:$0xf]
    %v685 = vld [vmem:[#allocation8 + $0x68] sm:$0xf]
    %v686 = vld [vmem:[#allocation8 + $0x6c] sm:$0xf]
    %v687 = vld [vmem:[#allocation8 + $0x70] sm:$0xf]
    %v688 = vld [vmem:[#allocation8 + $0x74] sm:$0xf]
    %v689 = vld [vmem:[#allocation8 + $0x78] sm:$0xf]
    %v690 = vld [vmem:[#allocation8 + $0x7c] sm:$0xf]
    %v691 = vld [vmem:[#allocation8 + $0x80] sm:$0xf]
    %v692 = vld [vmem:[#allocation8 + $0x84] sm:$0xf]
    %v693 = vld [vmem:[#allocation8 + $0x88] sm:$0xf]
    %v694 = vld [vmem:[#allocation8 + $0x8c] sm:$0xf]
    %v695 = vld [vmem:[#allocation8 + $0x90] sm:$0xf]
    %v696 = vld [vmem:[#allocation8 + $0x94] sm:$0xf]
    %v697 = vld [vmem:[#allocation8 + $0x98] sm:$0xf]
    %v698 = vld [vmem:[#allocation8 + $0x9c] sm:$0xf]
    %v699 = vld [vmem:[#allocation8 + $0xa0] sm:$0xf]
    %v700 = vld [vmem:[#allocation8 + $0xa4] sm:$0xf]
    %v701 = vld [vmem:[#allocation8 + $0xa8] sm:$0xf]
    %v702 = vld [vmem:[#allocation8 + $0xac] sm:$0xf]
    %v703 = vld [vmem:[#allocation8 + $0xb0] sm:$0xf]
    %v704 = vld [vmem:[#allocation8 + $0xb4] sm:$0xf]
    %v705 = vld [vmem:[#allocation8 + $0xb8] sm:$0xf]
    %v706 = vld [vmem:[#allocation8 + $0xbc] sm:$0xf]
    %v707 = vld [vmem:[#allocation8 + $0xc0] sm:$0xf]
    %v708 = vld [vmem:[#allocation8 + $0xc4] sm:$0xf]
    %v709 = vld [vmem:[#allocation8 + $0xc8] sm:$0xf]
    %v710 = vld [vmem:[#allocation8 + $0xcc] sm:$0xf]
    %v711 = vld [vmem:[#allocation8 + $0xd0] sm:$0xf]
    %v712 = vld [vmem:[#allocation8 + $0xd4] sm:$0xf]
    %v713 = vld [vmem:[#allocation8 + $0xd8] sm:$0xf]
    %v714 = vld [vmem:[#allocation8 + $0xdc] sm:$0xf]
    %v715 = vld [vmem:[#allocation8 + $0xe0] sm:$0xf]
    %v716 = vld [vmem:[#allocation8 + $0xe4] sm:$0xf]
    %v717 = vld [vmem:[#allocation8 + $0xe8] sm:$0xf]
    %v718 = vld [vmem:[#allocation8 + $0xec] sm:$0xf]
    %v719 = vld [vmem:[#allocation8 + $0xf0] sm:$0xf]
    %v720 = vld [vmem:[#allocation8 + $0xf4] sm:$0xf]
    %v721 = vld [vmem:[#allocation8 + $0xf8] sm:$0xf]
    %v722 = vld [vmem:[#allocation8 + $0xfc] sm:$0xf]
    %v723 = vld [vmem:[#allocation8 + $0x100] sm:$0xf]
    %v724 = vld [vmem:[#allocation8 + $0x104] sm:$0xf]
    %v725 = vld [vmem:[#allocation8 + $0x108] sm:$0xf]
    %v726 = vld [vmem:[#allocation8 + $0x10c] sm:$0xf]
    %v727 = vld [vmem:[#allocation8 + $0x110] sm:$0xf]
    %v728 = vld [vmem:[#allocation8 + $0x114] sm:$0xf]
    %v729 = vld [vmem:[#allocation8 + $0x118] sm:$0xf]
    %v730 = vld [vmem:[#allocation8 + $0x11c] sm:$0xf]
    %v731 = vld [vmem:[#allocation8 + $0x120] sm:$0xf]
    %v732 = vld [vmem:[#allocation8 + $0x124] sm:$0xf]
    %v733 = vld [vmem:[#allocation8 + $0x128] sm:$0xf]
    %v734 = vld [vmem:[#allocation8 + $0x12c] sm:$0xf]
    %v735 = vld [vmem:[#allocation8 + $0x130] sm:$0xf]
    %v736 = vld [vmem:[#allocation8 + $0x134] sm:$0xf]
    %v737 = vld [vmem:[#allocation8 + $0x138] sm:$0xf]
    %v738 = vld [vmem:[#allocation8 + $0x13c] sm:$0xf]
    %v739 = vld [vmem:[#allocation8 + $0x140] sm:$0xf]
    %v740 = vld [vmem:[#allocation8 + $0x144] sm:$0xf]
    %v741 = vld [vmem:[#allocation8 + $0x148] sm:$0xf]
    %v742 = vld [vmem:[#allocation8 + $0x14c] sm:$0xf]
    %v743 = vld [vmem:[#allocation8 + $0x150] sm:$0xf]
    %v744 = vld [vmem:[#allocation8 + $0x154] sm:$0xf]
    %v745 = vld [vmem:[#allocation8 + $0x158] sm:$0xf]
    %v746 = vld [vmem:[#allocation8 + $0x15c] sm:$0xf]
    %v747 = vld [vmem:[#allocation8 + $0x160] sm:$0xf]
    %v748 = vld [vmem:[#allocation8 + $0x164] sm:$0xf]
    %v749 = vld [vmem:[#allocation8 + $0x168] sm:$0xf]
    %v750 = vld [vmem:[#allocation8 + $0x16c] sm:$0xf]
    %v751 = vld [vmem:[#allocation8 + $0x170] sm:$0xf]
    %v752 = vld [vmem:[#allocation8 + $0x174] sm:$0xf]
    %v753 = vld [vmem:[#allocation8 + $0x178] sm:$0xf]
    %v754 = vld [vmem:[#allocation8 + $0x17c] sm:$0xf]
    %v755 = vld [vmem:[%s5] sm:$0x1]
    %v757 = vlaneseq
    %v758 = vshrl.u32 %v757, 7
    %v759 = vsub.s32 0, %v758
    %v760 = vrot.slane %v755, %v759
    %v768 = vunpack.c.l.b16 %v653
    %v769 = vunpack.c.h.b16 %v653
    %v770 = vunpack.c.l.b16 %v654
    %v771 = vunpack.c.h.b16 %v654
    %v772 = vunpack.c.l.b16 %v655
    %v773 = vunpack.c.h.b16 %v655
    %v774 = vunpack.c.l.b16 %v656
    %v775 = vunpack.c.h.b16 %v656
    %v776 = vunpack.c.l.b16 %v657
    %v777 = vunpack.c.h.b16 %v657
    %v778 = vunpack.c.l.b16 %v658
    %v779 = vunpack.c.h.b16 %v658
    %v780 = vpack.c.b16 %v774, %v768
    %v781 = vpack.c.b16 %v775, %v769
    %v782 = vpack.c.b16 %v776, %v770
    %v783 = vpack.c.b16 %v777, %v771
    %v784 = vpack.c.b16 %v778, %v772
    %v785 = vpack.c.b16 %v779, %v773
    %v888 = vunpack.c.l.b16 %v659
    %v889 = vunpack.c.l.b16 %v660
    %v890 = vunpack.c.l.b16 %v661
    %v891 = vunpack.c.l.b16 %v662
    %v892 = vunpack.c.l.b16 %v663
    %v893 = vunpack.c.l.b16 %v664
    %v894 = vunpack.c.l.b16 %v665
    %v895 = vunpack.c.l.b16 %v666
    %v896 = vunpack.c.l.b16 %v667
    %v897 = vunpack.c.l.b16 %v668
    %v898 = vunpack.c.l.b16 %v669
    %v899 = vunpack.c.l.b16 %v670
    %v900 = vunpack.c.l.b16 %v671
    %v901 = vunpack.c.l.b16 %v672
    %v902 = vunpack.c.l.b16 %v673
    %v903 = vunpack.c.l.b16 %v674
    %v904 = vunpack.c.l.b16 %v675
    %v905 = vunpack.c.l.b16 %v676
    %v906 = vunpack.c.l.b16 %v677
    %v907 = vunpack.c.l.b16 %v678
    %v908 = vunpack.c.l.b16 %v679
    %v909 = vunpack.c.l.b16 %v680
    %v910 = vunpack.c.l.b16 %v681
    %v911 = vunpack.c.l.b16 %v682
    %v912 = vunpack.c.l.b16 %v683
    %v913 = vunpack.c.l.b16 %v684
    %v914 = vunpack.c.l.b16 %v685
    %v915 = vunpack.c.l.b16 %v686
    %v916 = vunpack.c.l.b16 %v687
    %v917 = vunpack.c.l.b16 %v688
    %v918 = vunpack.c.l.b16 %v689
    %v919 = vunpack.c.l.b16 %v690
    %v920 = vunpack.c.l.b16 %v691
    %v921 = vunpack.c.l.b16 %v692
    %v922 = vunpack.c.l.b16 %v693
    %v923 = vunpack.c.l.b16 %v694
    %v924 = vunpack.c.l.b16 %v695
    %v925 = vunpack.c.l.b16 %v696
    %v926 = vunpack.c.l.b16 %v697
    %v927 = vunpack.c.l.b16 %v698
    %v928 = vunpack.c.l.b16 %v699
    %v929 = vunpack.c.l.b16 %v700
    %v930 = vunpack.c.l.b16 %v701
    %v931 = vunpack.c.l.b16 %v702
    %v932 = vunpack.c.l.b16 %v703
    %v933 = vunpack.c.l.b16 %v704
    %v934 = vunpack.c.l.b16 %v705
    %v935 = vunpack.c.l.b16 %v706
    %v936 = vunpack.c.l.b16 %v707
    %v937 = vunpack.c.l.b16 %v708
    %v938 = vunpack.c.l.b16 %v709
    %v939 = vunpack.c.l.b16 %v710
    %v940 = vunpack.c.l.b16 %v711
    %v941 = vunpack.c.l.b16 %v712
    %v942 = vunpack.c.l.b16 %v713
    %v943 = vunpack.c.l.b16 %v714
    %v944 = vunpack.c.l.b16 %v715
    %v945 = vunpack.c.l.b16 %v716
    %v946 = vunpack.c.l.b16 %v717
    %v947 = vunpack.c.l.b16 %v718
    %v948 = vunpack.c.l.b16 %v719
    %v949 = vunpack.c.l.b16 %v720
    %v950 = vunpack.c.l.b16 %v721
    %v951 = vunpack.c.l.b16 %v722
    %v952 = vunpack.c.l.b16 %v723
    %v953 = vunpack.c.l.b16 %v724
    %v954 = vunpack.c.l.b16 %v725
    %v955 = vunpack.c.l.b16 %v726
    %v956 = vunpack.c.l.b16 %v727
    %v957 = vunpack.c.l.b16 %v728
    %v958 = vunpack.c.l.b16 %v729
    %v959 = vunpack.c.l.b16 %v730
    %v960 = vunpack.c.l.b16 %v731
    %v961 = vunpack.c.l.b16 %v732
    %v962 = vunpack.c.l.b16 %v733
    %v963 = vunpack.c.l.b16 %v734
    %v964 = vunpack.c.l.b16 %v735
    %v965 = vunpack.c.l.b16 %v736
    %v966 = vunpack.c.l.b16 %v737
    %v967 = vunpack.c.l.b16 %v738
    %v968 = vunpack.c.l.b16 %v739
    %v969 = vunpack.c.l.b16 %v740
    %v970 = vunpack.c.l.b16 %v741
    %v971 = vunpack.c.l.b16 %v742
    %v972 = vunpack.c.l.b16 %v743
    %v973 = vunpack.c.l.b16 %v744
    %v974 = vunpack.c.l.b16 %v745
    %v975 = vunpack.c.l.b16 %v746
    %v976 = vunpack.c.l.b16 %v747
    %v977 = vunpack.c.l.b16 %v748
    %v978 = vunpack.c.l.b16 %v749
    %v979 = vunpack.c.l.b16 %v750
    %v980 = vunpack.c.l.b16 %v751
    %v981 = vunpack.c.l.b16 %v752
    %v982 = vunpack.c.l.b16 %v753
    %v983 = vunpack.c.l.b16 %v754
    %v984 = vpack.c.b16 %v889, %v888
    %v985 = vpack.c.b16 %v891, %v890
    %v986 = vpack.c.b16 %v893, %v892
    %v987 = vpack.c.b16 %v895, %v894
    %v988 = vpack.c.b16 %v897, %v896
    %v989 = vpack.c.b16 %v899, %v898
    %v990 = vpack.c.b16 %v901, %v900
    %v991 = vpack.c.b16 %v903, %v902
    %v992 = vpack.c.b16 %v905, %v904
    %v993 = vpack.c.b16 %v907, %v906
    %v994 = vpack.c.b16 %v909, %v908
    %v995 = vpack.c.b16 %v911, %v910
    %v996 = vpack.c.b16 %v913, %v912
    %v997 = vpack.c.b16 %v915, %v914
    %v998 = vpack.c.b16 %v917, %v916
    %v999 = vpack.c.b16 %v919, %v918
    %v1000 = vpack.c.b16 %v921, %v920
    %v1001 = vpack.c.b16 %v923, %v922
    %v1002 = vpack.c.b16 %v925, %v924
    %v1003 = vpack.c.b16 %v927, %v926
    %v1004 = vpack.c.b16 %v929, %v928
    %v1005 = vpack.c.b16 %v931, %v930
    %v1006 = vpack.c.b16 %v933, %v932
    %v1007 = vpack.c.b16 %v935, %v934
    %v1008 = vpack.c.b16 %v937, %v936
    %v1009 = vpack.c.b16 %v939, %v938
    %v1010 = vpack.c.b16 %v941, %v940
    %v1011 = vpack.c.b16 %v943, %v942
    %v1012 = vpack.c.b16 %v945, %v944
    %v1013 = vpack.c.b16 %v947, %v946
    %v1014 = vpack.c.b16 %v949, %v948
    %v1015 = vpack.c.b16 %v951, %v950
    %v1016 = vpack.c.b16 %v953, %v952
    %v1017 = vpack.c.b16 %v955, %v954
    %v1018 = vpack.c.b16 %v957, %v956
    %v1019 = vpack.c.b16 %v959, %v958
    %v1020 = vpack.c.b16 %v961, %v960
    %v1021 = vpack.c.b16 %v963, %v962
    %v1022 = vpack.c.b16 %v965, %v964
    %v1023 = vpack.c.b16 %v967, %v966
    %v1024 = vpack.c.b16 %v969, %v968
    %v1025 = vpack.c.b16 %v971, %v970
    %v1026 = vpack.c.b16 %v973, %v972
    %v1027 = vpack.c.b16 %v975, %v974
    %v1028 = vpack.c.b16 %v977, %v976
    %v1029 = vpack.c.b16 %v979, %v978
    %v1030 = vpack.c.b16 %v981, %v980
    %v1031 = vpack.c.b16 %v983, %v982
    %1080 = vmatprep.subr.bf16.mxu0 0
    %1081 = vmatpush1.bf16.msra.mxu0 %v991
    %1082 = vmatprep.subr.bf16.mxu0 0
    %1083 = vmatpush1.bf16.msra.mxu0 %v990
    %1084 = vmatprep.subr.bf16.mxu0 0
    %1085 = vmatpush1.bf16.msra.mxu0 %v989
    %1086 = vmatprep.subr.bf16.mxu0 0
    %1087 = vmatpush1.bf16.msra.mxu0 %v988
    %1088 = vmatprep.subr.bf16.mxu0 0
    %1089 = vmatpush1.bf16.msra.mxu0 %v987
    %1090 = vmatprep.subr.bf16.mxu0 0
    %1091 = vmatpush1.bf16.msra.mxu0 %v986
    %1092 = vmatprep.subr.bf16.mxu0 0
    %1093 = vmatpush1.bf16.msra.mxu0 %v985
    %1094 = vmatprep.subr.bf16.mxu0 0
    %1095 = vmatpush1.bf16.msra.mxu0 %v984
    %1096 = vmatprep.subr.bf16.mxu0 0
    %1097 = vmatpush2.bf16.msra.mxu0 %v999
    %1098 = vmatprep.subr.bf16.mxu0 0
    %1099 = vmatpush2.bf16.msra.mxu0 %v998
    %1100 = vmatprep.subr.bf16.mxu0 0
    %1101 = vmatpush2.bf16.msra.mxu0 %v997
    %1102 = vmatprep.subr.bf16.mxu0 0
    %1103 = vmatpush2.bf16.msra.mxu0 %v996
    %1104 = vmatprep.subr.bf16.mxu0 0
    %1105 = vmatpush2.bf16.msra.mxu0 %v995
    %1106 = vmatprep.subr.bf16.mxu0 0
    %1107 = vmatpush2.bf16.msra.mxu0 %v994
    %1108 = vmatprep.subr.bf16.mxu0 0
    %1109 = vmatpush2.bf16.msra.mxu0 %v993
    %1110 = vmatprep.subr.bf16.mxu0 0
    %1111 = vmatpush2.bf16.msra.mxu0 %v992
    %1112 = vmatprep.mubr.bf16.mxu0 %v781
    %1113 = vmatmul.mubr.bf16.gmra.mxu0 %v780
    %v1114 = vpop.f32.mrf.mxu0
    %v1115 = vadd.f32 %v760, %v1114
    %v1116 = vpop.f32.mrf.mxu0
    %v1117 = vpop.f32.mrf.mxu0
    %v1118 = vadd.f32 %v760, %v1117
    %v1119 = vpop.f32.mrf.mxu0
    %1120 = vdwg.mxu0
    %1121 = vmatprep.subr.bf16.mxu0 0
    %1122 = vmatpush1.bf16.msra.mxu0 %v1007
    %1123 = vmatprep.subr.bf16.mxu0 0
    %1124 = vmatpush1.bf16.msra.mxu0 %v1006
    %1125 = vmatprep.subr.bf16.mxu0 0
    %1126 = vmatpush1.bf16.msra.mxu0 %v1005
    %1127 = vmatprep.subr.bf16.mxu0 0
    %1128 = vmatpush1.bf16.msra.mxu0 %v1004
    %1129 = vmatprep.subr.bf16.mxu0 0
    %1130 = vmatpush1.bf16.msra.mxu0 %v1003
    %1131 = vmatprep.subr.bf16.mxu0 0
    %1132 = vmatpush1.bf16.msra.mxu0 %v1002
    %1133 = vmatprep.subr.bf16.mxu0 0
    %1134 = vmatpush1.bf16.msra.mxu0 %v1001
    %1135 = vmatprep.subr.bf16.mxu0 0
    %1136 = vmatpush1.bf16.msra.mxu0 %v1000
    %1137 = vmatprep.subr.bf16.mxu0 0
    %1138 = vmatpush2.bf16.msra.mxu0 %v1015
    %1139 = vmatprep.subr.bf16.mxu0 0
    %1140 = vmatpush2.bf16.msra.mxu0 %v1014
    %1141 = vmatprep.subr.bf16.mxu0 0
    %1142 = vmatpush2.bf16.msra.mxu0 %v1013
    %1143 = vmatprep.subr.bf16.mxu0 0
    %1144 = vmatpush2.bf16.msra.mxu0 %v1012
    %1145 = vmatprep.subr.bf16.mxu0 0
    %1146 = vmatpush2.bf16.msra.mxu0 %v1011
    %1147 = vmatprep.subr.bf16.mxu0 0
    %1148 = vmatpush2.bf16.msra.mxu0 %v1010
    %1149 = vmatprep.subr.bf16.mxu0 0
    %1150 = vmatpush2.bf16.msra.mxu0 %v1009
    %1151 = vmatprep.subr.bf16.mxu0 0
    %1152 = vmatpush2.bf16.msra.mxu0 %v1008
    %1153 = vmatprep.mubr.bf16.mxu0 %v783
    %1154 = vmatmul.mubr.bf16.gmra.mxu0 %v782
    %v1155 = vpop.f32.mrf.mxu0
    %v1156 = vadd.f32 %v1115, %v1155
    %v1157 = vpop.f32.mrf.mxu0
    %v1158 = vpop.f32.mrf.mxu0
    %v1159 = vadd.f32 %v1118, %v1158
    %v1160 = vpop.f32.mrf.mxu0
    %1161 = vdwg.mxu0
    %1162 = vmatprep.subr.bf16.mxu0 0
    %1163 = vmatpush1.bf16.msra.mxu0 %v1023
    %1164 = vmatprep.subr.bf16.mxu0 0
    %1165 = vmatpush1.bf16.msra.mxu0 %v1022
    %1166 = vmatprep.subr.bf16.mxu0 0
    %1167 = vmatpush1.bf16.msra.mxu0 %v1021
    %1168 = vmatprep.subr.bf16.mxu0 0
    %1169 = vmatpush1.bf16.msra.mxu0 %v1020
    %1170 = vmatprep.subr.bf16.mxu0 0
    %1171 = vmatpush1.bf16.msra.mxu0 %v1019
    %1172 = vmatprep.subr.bf16.mxu0 0
    %1173 = vmatpush1.bf16.msra.mxu0 %v1018
    %1174 = vmatprep.subr.bf16.mxu0 0
    %1175 = vmatpush1.bf16.msra.mxu0 %v1017
    %1176 = vmatprep.subr.bf16.mxu0 0
    %1177 = vmatpush1.bf16.msra.mxu0 %v1016
    %1178 = vmatprep.subr.bf16.mxu0 0
    %1179 = vmatpush2.bf16.msra.mxu0 %v1031
    %1180 = vmatprep.subr.bf16.mxu0 0
    %1181 = vmatpush2.bf16.msra.mxu0 %v1030
    %1182 = vmatprep.subr.bf16.mxu0 0
    %1183 = vmatpush2.bf16.msra.mxu0 %v1029
    %1184 = vmatprep.subr.bf16.mxu0 0
    %1185 = vmatpush2.bf16.msra.mxu0 %v1028
    %1186 = vmatprep.subr.bf16.mxu0 0
    %1187 = vmatpush2.bf16.msra.mxu0 %v1027
    %1188 = vmatprep.subr.bf16.mxu0 0
    %1189 = vmatpush2.bf16.msra.mxu0 %v1026
    %1190 = vmatprep.subr.bf16.mxu0 0
    %1191 = vmatpush2.bf16.msra.mxu0 %v1025
    %1192 = vmatprep.subr.bf16.mxu0 0
    %1193 = vmatpush2.bf16.msra.mxu0 %v1024
    %1194 = vmatprep.mubr.bf16.mxu0 %v785
    %1195 = vmatmul.mubr.bf16.gmra.mxu0 %v784
    %v1196 = vpop.f32.mrf.mxu0
    %v1197 = vadd.f32 %v1156, %v1196
    %v1198 = vpop.f32.mrf.mxu0
    %v1199 = vpop.f32.mrf.mxu0
    %v1200 = vadd.f32 %v1159, %v1199
    %v1201 = vpop.f32.mrf.mxu0
    %1202 = vdwg.mxu0
    %v1205 = vunpack.c.l.s4 1966171168
    %v1206 = vunpack.c.0.s8 %v1205
    %v1207 = vlaneseq
    %v1208 = vshrl.u32 %v1207, 7
    %v1209 = vsub.s32 %v1206, %v1208
    %v1210 = vrot.slane %v648, %v1209
    %v1211 = vcombine.high %v1210, %v1210
    %v1213 = vunpack.c.l.s4 1966171168
    %v1214 = vunpack.c.0.s8 %v1213
    %v1215 = vlaneseq
    %v1216 = vshrl.u32 %v1215, 7
    %v1217 = vsub.s32 %v1214, %v1216
    %v1218 = vrot.slane %v1210, %v1217
    %v1220 = vunpack.c.l.s4 1966171168
    %v1221 = vunpack.c.0.s8 %v1220
    %v1222 = vlaneseq
    %v1223 = vshrl.u32 %v1222, 7
    %v1224 = vsub.s32 %v1221, %v1223
    %v1225 = vrot.slane %v1211, %v1224
    %1228 = vmatprep.subr.mxu0 0.0
    %1229 = vmatpush1.xpose.msra.mxu0 0.0
    %1230 = vmatprep.subr.mxu0 0.0
    %1231 = vmatpush1.xpose.msra.mxu0 0.0
    %1232 = vmatprep.subr.mxu0 0.0
    %1233 = vmatpush1.xpose.msra.mxu0 0.0
    %1234 = vmatprep.subr.mxu0 0.0
    %1235 = vmatpush1.xpose.msra.mxu0 0.0
    %1236 = vmatprep.subr.mxu0 0.0
    %1237 = vmatpush1.xpose.msra.mxu0 0.0
    %1238 = vmatprep.subr.mxu0 0.0
    %1239 = vmatpush1.xpose.msra.mxu0 0.0
    %1240 = vmatprep.subr.mxu0 0.0
    %1241 = vmatpush1.xpose.msra.mxu0 0.0
    %1242 = vmatprep.subr.mxu0 0.0
    %1243 = vmatpush1.xpose.msra.mxu0 0.0
    %1244 = vmatprep.subr.mxu0 0.0
    %1245 = vmatpush1.xpose.msra.mxu0 0.0
    %1246 = vmatprep.subr.mxu0 0.0
    %1247 = vmatpush1.xpose.msra.mxu0 0.0
    %1248 = vmatprep.subr.mxu0 0.0
    %1249 = vmatpush1.xpose.msra.mxu0 0.0
    %1250 = vmatprep.subr.mxu0 0.0
    %1251 = vmatpush1.xpose.msra.mxu0 0.0
    %1252 = vmatprep.subr.mxu0 0.0
    %1253 = vmatpush1.xpose.msra.mxu0 0.0
    %1254 = vmatprep.subr.mxu0 0.0
    %1255 = vmatpush1.xpose.msra.mxu0 0.0
    %1256 = vmatprep.subr.mxu0 0.0
    %1257 = vmatpush1.xpose.msra.mxu0 0.0
    %1258 = vmatprep.subr.mxu0 0.0
    %1259 = vmatpush1.xpose.msra.mxu0 %v1197
    %1260 = vmatprep.subr.mxu0 0.0
    %1261 = vmatpush2.xpose.msra.mxu0 0.0
    %1262 = vmatprep.subr.mxu0 0.0
    %1263 = vmatpush2.xpose.msra.mxu0 0.0
    %1264 = vmatprep.subr.mxu0 0.0
    %1265 = vmatpush2.xpose.msra.mxu0 0.0
    %1266 = vmatprep.subr.mxu0 0.0
    %1267 = vmatpush2.xpose.msra.mxu0 0.0
    %1268 = vmatprep.subr.mxu0 0.0
    %1269 = vmatpush2.xpose.msra.mxu0 0.0
    %1270 = vmatprep.subr.mxu0 0.0
    %1271 = vmatpush2.xpose.msra.mxu0 0.0
    %1272 = vmatprep.subr.mxu0 0.0
    %1273 = vmatpush2.xpose.msra.mxu0 0.0
    %1274 = vmatprep.subr.mxu0 0.0
    %1275 = vmatpush2.xpose.msra.mxu0 0.0
    %1276 = vmatprep.subr.mxu0 0.0
    %1277 = vmatpush2.xpose.msra.mxu0 0.0
    %1278 = vmatprep.subr.mxu0 0.0
    %1279 = vmatpush2.xpose.msra.mxu0 0.0
    %1280 = vmatprep.subr.mxu0 0.0
    %1281 = vmatpush2.xpose.msra.mxu0 0.0
    %1282 = vmatprep.subr.mxu0 0.0
    %1283 = vmatpush2.xpose.msra.mxu0 0.0
    %1284 = vmatprep.subr.mxu0 0.0
    %1285 = vmatpush2.xpose.msra.mxu0 0.0
    %1286 = vmatprep.subr.mxu0 0.0
    %1287 = vmatpush2.xpose.msra.mxu0 0.0
    %1288 = vmatprep.subr.mxu0 0.0
    %1289 = vmatpush2.xpose.msra.mxu0 0.0
    %1290 = vmatprep.subr.mxu0 0.0
    %1291 = vmatpush2.xpose.msra.mxu0 0.0
    %1292 = vmatprep.mubr.f32.mxu0 0.0
    %1293 = vmatmul.mubr.f32.gmra.mxu0 %v1218
    %v1294 = vpop.f32.mrf.mxu0
    %v1295 = vadd.f32 0.0, %v1294
    %v1296 = vpop.f32.mrf.mxu0
    %1297 = vdwg.mxu0
    %1298 = vmatprep.subr.mxu0 0.0
    %1299 = vmatpush1.xpose.msra.mxu0 0.0
    %1300 = vmatprep.subr.mxu0 0.0
    %1301 = vmatpush1.xpose.msra.mxu0 0.0
    %1302 = vmatprep.subr.mxu0 0.0
    %1303 = vmatpush1.xpose.msra.mxu0 0.0
    %1304 = vmatprep.subr.mxu0 0.0
    %1305 = vmatpush1.xpose.msra.mxu0 0.0
    %1306 = vmatprep.subr.mxu0 0.0
    %1307 = vmatpush1.xpose.msra.mxu0 0.0
    %1308 = vmatprep.subr.mxu0 0.0
    %1309 = vmatpush1.xpose.msra.mxu0 0.0
    %1310 = vmatprep.subr.mxu0 0.0
    %1311 = vmatpush1.xpose.msra.mxu0 0.0
    %1312 = vmatprep.subr.mxu0 0.0
    %1313 = vmatpush1.xpose.msra.mxu0 0.0
    %1314 = vmatprep.subr.mxu0 0.0
    %1315 = vmatpush1.xpose.msra.mxu0 0.0
    %1316 = vmatprep.subr.mxu0 0.0
    %1317 = vmatpush1.xpose.msra.mxu0 0.0
    %1318 = vmatprep.subr.mxu0 0.0
    %1319 = vmatpush1.xpose.msra.mxu0 0.0
    %1320 = vmatprep.subr.mxu0 0.0
    %1321 = vmatpush1.xpose.msra.mxu0 0.0
    %1322 = vmatprep.subr.mxu0 0.0
    %1323 = vmatpush1.xpose.msra.mxu0 0.0
    %1324 = vmatprep.subr.mxu0 0.0
    %1325 = vmatpush1.xpose.msra.mxu0 0.0
    %1326 = vmatprep.subr.mxu0 0.0
    %1327 = vmatpush1.xpose.msra.mxu0 0.0
    %1328 = vmatprep.subr.mxu0 0.0
    %1329 = vmatpush1.xpose.msra.mxu0 %v1200
    %1330 = vmatprep.subr.mxu0 0.0
    %1331 = vmatpush2.xpose.msra.mxu0 0.0
    %1332 = vmatprep.subr.mxu0 0.0
    %1333 = vmatpush2.xpose.msra.mxu0 0.0
    %1334 = vmatprep.subr.mxu0 0.0
    %1335 = vmatpush2.xpose.msra.mxu0 0.0
    %1336 = vmatprep.subr.mxu0 0.0
    %1337 = vmatpush2.xpose.msra.mxu0 0.0
    %1338 = vmatprep.subr.mxu0 0.0
    %1339 = vmatpush2.xpose.msra.mxu0 0.0
    %1340 = vmatprep.subr.mxu0 0.0
    %1341 = vmatpush2.xpose.msra.mxu0 0.0
    %1342 = vmatprep.subr.mxu0 0.0
    %1343 = vmatpush2.xpose.msra.mxu0 0.0
    %1344 = vmatprep.subr.mxu0 0.0
    %1345 = vmatpush2.xpose.msra.mxu0 0.0
    %1346 = vmatprep.subr.mxu0 0.0
    %1347 = vmatpush2.xpose.msra.mxu0 0.0
    %1348 = vmatprep.subr.mxu0 0.0
    %1349 = vmatpush2.xpose.msra.mxu0 0.0
    %1350 = vmatprep.subr.mxu0 0.0
    %1351 = vmatpush2.xpose.msra.mxu0 0.0
    %1352 = vmatprep.subr.mxu0 0.0
    %1353 = vmatpush2.xpose.msra.mxu0 0.0
    %1354 = vmatprep.subr.mxu0 0.0
    %1355 = vmatpush2.xpose.msra.mxu0 0.0
    %1356 = vmatprep.subr.mxu0 0.0
    %1357 = vmatpush2.xpose.msra.mxu0 0.0
    %1358 = vmatprep.subr.mxu0 0.0
    %1359 = vmatpush2.xpose.msra.mxu0 0.0
    %1360 = vmatprep.subr.mxu0 0.0
    %1361 = vmatpush2.xpose.msra.mxu0 0.0
    %1362 = vmatprep.mubr.f32.mxu0 0.0
    %1363 = vmatmul.mubr.f32.gmra.mxu0 %v1225
    %v1364 = vpop.f32.mrf.mxu0
    %v1365 = vadd.f32 0.0, %v1364
    %v1366 = vpop.f32.mrf.mxu0
    %1367 = vdwg.mxu0
    %v1368 = vlaneseq
    %v1369 = vshrl.u32 %v1368, 7
    %v1370 = vlaneseq
    %v1371 = vand.u32 %v1370, 127
    %vm1372 = vcmp.eq.s32.totalorder %v1369, %v1371
    %v1373 = vsel %vm1372, 1, 0
    %v1374 = vcvt.s32.f32 %v1373
    %v1377 = vrot.slane %v1365, 7
    %vm1378 = vcmask 1041409
    %v1379 = vsel %vm1378, %v1377, %v1295
    %vm1380 = vcmask 64512
    %v1381 = vsel %vm1380, %v1379, 0
    %1383 = vmatprep.subr.mxu0 0.0
    %1384 = vmatpush1.msra.mxu0 0.0
    %1385 = vmatprep.subr.mxu0 0.0
    %1386 = vmatpush1.msra.mxu0 0.0
    %1387 = vmatprep.subr.mxu0 0.0
    %1388 = vmatpush1.msra.mxu0 0.0
    %1389 = vmatprep.subr.mxu0 0.0
    %1390 = vmatpush1.msra.mxu0 0.0
    %1391 = vmatprep.subr.mxu0 0.0
    %1392 = vmatpush1.msra.mxu0 0.0
    %1393 = vmatprep.subr.mxu0 0.0
    %1394 = vmatpush1.msra.mxu0 0.0
    %1395 = vmatprep.subr.mxu0 0.0
    %1396 = vmatpush1.msra.mxu0 0.0
    %1397 = vmatprep.subr.mxu0 0.0
    %1398 = vmatpush1.msra.mxu0 0.0
    %1399 = vmatprep.subr.mxu0 0.0
    %1400 = vmatpush1.msra.mxu0 0.0
    %1401 = vmatprep.subr.mxu0 0.0
    %1402 = vmatpush1.msra.mxu0 0.0
    %1403 = vmatprep.subr.mxu0 0.0
    %1404 = vmatpush1.msra.mxu0 0.0
    %1405 = vmatprep.subr.mxu0 0.0
    %1406 = vmatpush1.msra.mxu0 0.0
    %1407 = vmatprep.subr.mxu0 0.0
    %1408 = vmatpush1.msra.mxu0 0.0
    %1409 = vmatprep.subr.mxu0 0.0
    %1410 = vmatpush1.msra.mxu0 0.0
    %1411 = vmatprep.subr.mxu0 0.0
    %1412 = vmatpush1.msra.mxu0 0.0
    %1413 = vmatprep.subr.mxu0 0.0
    %1414 = vmatpush1.msra.mxu0 %v1374
    %1415 = vmatprep.subr.mxu0 0.0
    %1416 = vmatpush2.msra.mxu0 0.0
    %1417 = vmatprep.subr.mxu0 0.0
    %1418 = vmatpush2.msra.mxu0 0.0
    %1419 = vmatprep.subr.mxu0 0.0
    %1420 = vmatpush2.msra.mxu0 0.0
    %1421 = vmatprep.subr.mxu0 0.0
    %1422 = vmatpush2.msra.mxu0 0.0
    %1423 = vmatprep.subr.mxu0 0.0
    %1424 = vmatpush2.msra.mxu0 0.0
    %1425 = vmatprep.subr.mxu0 0.0
    %1426 = vmatpush2.msra.mxu0 0.0
    %1427 = vmatprep.subr.mxu0 0.0
    %1428 = vmatpush2.msra.mxu0 0.0
    %1429 = vmatprep.subr.mxu0 0.0
    %1430 = vmatpush2.msra.mxu0 0.0
    %1431 = vmatprep.subr.mxu0 0.0
    %1432 = vmatpush2.msra.mxu0 0.0
    %1433 = vmatprep.subr.mxu0 0.0
    %1434 = vmatpush2.msra.mxu0 0.0
    %1435 = vmatprep.subr.mxu0 0.0
    %1436 = vmatpush2.msra.mxu0 0.0
    %1437 = vmatprep.subr.mxu0 0.0
    %1438 = vmatpush2.msra.mxu0 0.0
    %1439 = vmatprep.subr.mxu0 0.0
    %1440 = vmatpush2.msra.mxu0 0.0
    %1441 = vmatprep.subr.mxu0 0.0
    %1442 = vmatpush2.msra.mxu0 0.0
    %1443 = vmatprep.subr.mxu0 0.0
    %1444 = vmatpush2.msra.mxu0 0.0
    %1445 = vmatprep.subr.mxu0 0.0
    %1446 = vmatpush2.msra.mxu0 0.0
    %1447 = vmatprep.mubr.f32.mxu0 0.0
    %1448 = vmatmul.mubr.f32.gmra.mxu0 %v1381
    %v1449 = vpop.f32.mrf.mxu0
    %v1450 = vadd.f32 0.0, %v1449
    %v1451 = vpop.f32.mrf.mxu0
    %1452 = vdwg.mxu0
    %v1453 = vld [vmem:[%s6] sm:$0x3]
    %v1454 = vld [vmem:[%s7] sm:$0x3]
    %vm1455 = vcmp.gt.f32.partialorder %v1453, 0.0
    %v1456 = vsel %vm1455, %v1450, -inf
    %1457 = vst [vmem:[#allocation10] sm:$0x3] %v1456
    %v1458 = vmax.f32 %v1450, 0.0
    %v1459 = vmul.f32 %v1450, %v1454
    %v1460 = vsub.f32 %v1458, %v1459
    %v1461 = vand.u32 2147483647, %v1450
    %v1462 = vsub.f32 0.0, %v1461
    %v1463 = vmul.f32 %v1462, 1.442695
    %v1464 = vpow.pop %v1463
    %v1465 = vadd.f32 %v1464, 1.0
    %v1466 = vlog2.pop %v1465
    %v1467 = vmul.f32 %v1466, 0.6931472
    %v1468 = vadd.f32 %v1460, %v1467
    %v1469 = vsel %vm1455, %v1468, 0.0
    %vm1470 = vcmask 1041408
    %v1471 = vsel %vm1470, %v1453, 0.0
    %1472 = vadd.xlane.f32.xlu0 %v1471
    %v1473 = vpop.xlane.xlu0 %1472
    %v1474 = vrot.slane %v1473, 4
    %v1475 = vadd.f32 %v1473, %v1474
    %v1476 = vrot.slane %v1475, 2
    %v1477 = vadd.f32 %v1475, %v1476
    %v1478 = vrot.slane %v1477, 1
    %v1479 = vadd.f32 %v1477, %v1478
    %s1480 = vtos %v1479
    %v1481 = vstv %s1480
    %v1482 = vmax.f32 %v1481, 1.0
    %v1483 = vsel %vm1470, %v1469, 0.0
    %1484 = vadd.xlane.f32.xlu0 %v1483
    %v1485 = vpop.xlane.xlu0 %1484
    %v1486 = vrot.slane %v1485, 4
    %v1487 = vadd.f32 %v1485, %v1486
    %v1488 = vrot.slane %v1487, 2
    %v1489 = vadd.f32 %v1487, %v1488
    %v1490 = vrot.slane %v1489, 1
    %v1491 = vadd.f32 %v1489, %v1490
    %s1492 = vtos %v1491
    %v1493 = vstv %s1492
    %v1494 = vrcp.pop %v1482
    %v1495 = vmul.f32 %v1493, %v1494
    %vm1496 = vcmask 0
    %1497 = vst.msk [vmem:[#allocation11] sm:$0x1] %vm1496, %v1495
    // Predicated region
    $region50: #{tpu_custom_call.1} parent=1 // pred_check
      _
    $region51: #{tpu_custom_call.1} parent=1 // pred_check_branch
      %1499 = sbr.rel (0) target = $region53
    $region52: #{tpu_custom_call.1} parent=1 // pred_region
      %s1501 = ssub.s32 32, 32
      %1502 = vsyncadd [#allocation4], %s1501
      %s1504 = sshll.u32 [#allocation10], 4
      %s1505 = int_to_ptr.vmem [resolvable:$true] %s1504
      %1507 = dma.vmem_to_hbm [thread:$0]  %s1505, 32, %s8, [#allocation4]
    $region53: #{tpu_custom_call.1} parent=1 // pred_fallthru
      _
    // Predicated region
    $region54: #{tpu_custom_call.1} parent=1 // pred_check
      _
    $region55: #{tpu_custom_call.1} parent=1 // pred_check_branch
      %1509 = sbr.rel (0) target = $region57
    $region56: #{tpu_custom_call.1} parent=1 // pred_region
      %s1511 = ssub.s32 16, 16
      %1512 = vsyncadd [#allocation12], %s1511
      %s1514 = sshll.u32 [#allocation11], 4
      %s1515 = int_to_ptr.vmem [resolvable:$true] %s1514
      %1517 = dma.vmem_to_hbm [thread:$0]  %s1515, 16, %s9, [#allocation12]
    $region57: #{tpu_custom_call.1} parent=1 // pred_fallthru
      _
    // Predicated region
    $region58: #{tpu_custom_call.1} parent=1 // pred_check
      _
    $region59: #{tpu_custom_call.1} parent=1 // pred_check_branch
      %1519 = sbr.rel (0) target = $region61
    $region60: #{tpu_custom_call.1} parent=1 // pred_region
      %1520 = dma.done [#allocation4], 32
    $region61: #{tpu_custom_call.1} parent=1 // pred_fallthru
      _
    // Predicated region
    $region62: #{tpu_custom_call.1} parent=1 // pred_check
      _
    $region63: #{tpu_custom_call.1} parent=1 // pred_check_branch
      %1522 = sbr.rel (0) target = $region65
    $region64: #{tpu_custom_call.1} parent=1 // pred_region
      %1523 = dma.done [#allocation12], 16
    $region65: #{tpu_custom_call.1} parent=1 // pred_fallthru
      _
    %1524 = vsyncpa [#allocation3], 1
    %1525 = vsyncpa [#allocation6], 1
    %1526 = vsyncpa [#allocation9], 1
    %1527 = vsyncpa [#allocation4], 1
    %1528 = vsyncpa [#allocation12], 1

</llo_original>
